<compile_context>
chip_gen: v7x
topology: tpu7x:2x2x1
jax: 0.10.0
libtpu: 0.0.40
codegen_flags: <defaults>
</compile_context>

<pallas_src>
import functools

import jax
import jax.numpy as jnp
from jax.experimental import pallas as pl
from jax.experimental.pallas import tpu as pltpu


def _euclid_assign_kernel(x_ref, caug_ref, csq_ref, dist_ref, assign_ref, *, alpha):
    # x_ref:      (1, C, TM)  raw features, channels on sublanes, pixels on lanes
    # caug_ref:   (K, C+1)    [cluster_center | -0.5]   (grid-resident)
    # csq_ref:    (1, K)      per-cluster squared norms (grid-resident)
    # dist_ref:   (1, TM, K)
    # assign_ref: (1, TM, K)
    x = x_ref[0].astype(jnp.float32)                        # (C, TM)

    # F.normalize(x, p=2, dim=channel) with eps=1e-12 clamp on the norm.
    sum_sq = jnp.sum(x * x, axis=0, keepdims=True)          # (1, TM)
    inv_norm = jax.lax.rsqrt(jnp.maximum(sum_sq, 1e-24))    # == 1/max(||x||,1e-12)
    x_n = x * inv_norm                                      # (C, TM)
    xn_sq = sum_sq * (inv_norm * inv_norm)                  # (1, TM) == ||x_n||^2

    # d(m,k)^2 = ||x_n(m)||^2 + ||c(k)||^2 - 2 x_n(m).c(k)
    # The ||x_n||^2 term rides through the matmul via the augmented row, so it
    # arrives already in the (TM, K) layout:
    #   dot[m,k] = x_n(m).c(k) - 0.5 * ||x_n(m)||^2
    x_aug = jnp.concatenate([x_n, xn_sq], axis=0)           # (C+1, TM)
    dot = jax.lax.dot_general(
        x_aug, caug_ref[...],
        dimension_numbers=(((0,), (1,)), ((), ())),
        preferred_element_type=jnp.float32)                 # (TM, K)

    d2 = jnp.maximum(csq_ref[...] - 2.0 * dot, 0.0)         # (TM, K)
    d = jnp.sqrt(d2)
    dist_ref[0] = d.astype(dist_ref.dtype)

    # NegSoftAssign over the cluster (lane) dim.
    d_min = jnp.min(d, axis=-1, keepdims=True)              # (TM, 1)
    e = jnp.exp(-alpha * (d - d_min))                       # (TM, K)
    denom = jnp.sum(e, axis=-1, keepdims=True)              # (TM, 1)
    inv = pl.reciprocal(denom, approx=True)                 # EUP
    inv = inv * (2.0 - denom * inv)                         # one Newton step -> f32 acc
    assign_ref[0] = (e * inv).astype(assign_ref.dtype)


def _pick_tile(M, C, K):
    """Largest tile (multiple of 128, divisor of M) within a VMEM budget."""
    try:
        vmem_bytes = int(pltpu.get_tpu_info().vmem_capacity_bytes)
    except Exception:
        vmem_bytes = 64 * 1024 * 1024            # conservative (v7x-sized) fallback
    # v5e/v6e (128 MiB VMEM): up to 1024 rows; v7x (64 MiB): up to 512 rows.
    cap = 1024 if vmem_bytes >= 96 * 1024 * 1024 else 512
    # Keep double-buffered blocks (x input + 2 outputs) well under ~1/8 of VMEM.
    per_row_bytes = 2 * (C + 2 * K) * 4
    cap = max(128, min(cap, (vmem_bytes // 8 // per_row_bytes) // 128 * 128))
    if M % 128 != 0:
        return M                                 # single full-M block (still legal)
    t = min(cap, M)
    while t >= 128:
        if M % t == 0:
            return t
        t -= 128
    return M


def euclid_distance_assign(x_nchw, cluster_center, *, alpha=32.0, tm=None):
    """x_nchw: (B, C, H, W); cluster_center: (K, C).

    Returns (x_distance, x_distance_assign), each of shape (B, H, W, K) float32.
    """
    B, C, H, W = x_nchw.shape
    K, D = cluster_center.shape
    assert D == C
    M = H * W

    if tm is None:
        tm = _pick_tile(M, C, K)
    assert M % tm == 0 and (tm % 128 == 0 or tm == M)

    # Free reshape: NCHW -> (B, C, M).  No transpose, no extra HBM pass.
    x_bcm = x_nchw.reshape(B, C, M)

    # Hoisted, tiny, grid-resident center-side precompute.
    c32 = cluster_center.astype(jnp.float32)
    c_aug = jnp.concatenate(
        [c32, jnp.full((K, 1), -0.5, dtype=jnp.float32)], axis=1)  # (K, C+1)
    c_sq = jnp.sum(c32 * c32, axis=1)[None, :]                     # (1, K)

    kernel = functools.partial(_euclid_assign_kernel, alpha=float(alpha))

    dist, assign = pl.pallas_call(
        kernel,
        out_shape=(
            jax.ShapeDtypeStruct((B, M, K), jnp.float32),
            jax.ShapeDtypeStruct((B, M, K), jnp.float32),
        ),
        grid_spec=pltpu.PrefetchScalarGridSpec(
            num_scalar_prefetch=0,
            grid=(B, M // tm),
            in_specs=[
                pl.BlockSpec((1, C, tm), lambda b, m: (b, 0, m)),
                pl.BlockSpec((K, C + 1), lambda b, m: (0, 0)),
                pl.BlockSpec((1, K), lambda b, m: (0, 0)),
            ],
            out_specs=[
                pl.BlockSpec((1, tm, K), lambda b, m: (b, m, 0)),
                pl.BlockSpec((1, tm, K), lambda b, m: (b, m, 0)),
            ],
        ),
        compiler_params=pltpu.CompilerParams(
            dimension_semantics=("parallel", "parallel"),
            vmem_limit_bytes=32 * 1024 * 1024,
        ),
    )(x_bcm, c_aug, c_sq)

    return dist.reshape(B, H, W, K), assign.reshape(B, H, W, K)


def _reference(x_nchw, cluster_center, alpha=32.0):
    # Pure-JAX reference for correctness check (diff-based cdist).
    B, C, H, W = x_nchw.shape
    K, _ = cluster_center.shape
    norm = jnp.sqrt(jnp.sum(x_nchw * x_nchw, axis=1, keepdims=True))
    xn = x_nchw / jnp.maximum(norm, 1e-12)
    x_re = jnp.transpose(xn, (0, 2, 3, 1)).reshape(B, H * W, C)
    diff = x_re[:, :, None, :] - cluster_center[None, None, :, :]
    d = jnp.sqrt(jnp.sum(diff * diff, axis=-1)).reshape(B, H, W, K)
    d_min = jnp.min(d, axis=-1, keepdims=True)
    e = jnp.exp(-alpha * (d - d_min))
    return d, e / jnp.sum(e, axis=-1, keepdims=True)


if __name__ == "__main__":
    key = jax.random.PRNGKey(0)
    k_x, k_c = jax.random.split(key)

    B, C, H, W = 2, 32, 16, 16         # feature_dim = 32
    K = 64                             # cluster_num = 64
    alpha = 32.0

    x = jax.random.normal(k_x, (B, C, H, W), dtype=jnp.float32)
    # torch.rand(cluster_num, feature_dim) -> uniform [0, 1)
    cluster_center = jax.random.uniform(k_c, (K, C), dtype=jnp.float32)

    dist, assign = euclid_distance_assign(x, cluster_center, alpha=alpha)
    jax.block_until_ready((dist, assign))

    ref_dist, ref_assign = _reference(x, cluster_center, alpha=alpha)
    assert jnp.allclose(dist, ref_dist, atol=1e-4, rtol=1e-4)
    assert jnp.allclose(assign, ref_assign, atol=1e-4, rtol=1e-4)

    print("KERNEL_OK")
</pallas_src>

<mosaic_0001>
module attributes {stable_mosaic.version = 11 : i64} {
  func.func @_euclid_assign_kernel(%arg0: i32, %arg1: i32, %arg2: memref<1x32x256xf32, #tpu.memory_space<vmem>>, %arg3: memref<64x33xf32, #tpu.memory_space<vmem>>, %arg4: memref<1x64xf32, #tpu.memory_space<vmem>>, %arg5: memref<1x256x64xf32, #tpu.memory_space<vmem>>, %arg6: memref<1x256x64xf32, #tpu.memory_space<vmem>>) attributes {dimension_semantics = [#tpu.dimension_semantics<parallel>, #tpu.dimension_semantics<parallel>], iteration_bounds = array<i64: 2, 1>, scalar_prefetch = 0 : i64, scratch_operands = 0 : i64, tpu.core_type = #tpu.core_type<tc>, window_params = [{transform_indices = @transform_0, window_bounds = array<i64: 1, 32, 256>}, {pipeline_mode = #tpu.pipeline_mode<synchronous>, transform_indices = @transform_1, window_bounds = array<i64: 64, 33>}, {pipeline_mode = #tpu.pipeline_mode<synchronous>, transform_indices = @transform_2, window_bounds = array<i64: 1, 64>}, {transform_indices = @transform_3, window_bounds = array<i64: 1, 256, 64>}, {transform_indices = @transform_4, window_bounds = array<i64: 1, 256, 64>}]} {
    %c0 = arith.constant 0 : index
    %c0_0 = arith.constant 0 : index
    %c0_1 = arith.constant 0 : index
    %0 = vector.load %arg2[%c0, %c0_0, %c0_1] : memref<1x32x256xf32, #tpu.memory_space<vmem>>, vector<1x32x256xf32>
    %1 = vector.shape_cast %0 : vector<1x32x256xf32> to vector<32x256xf32>
    %2 = arith.mulf %1, %1 : vector<32x256xf32>
    %cst = arith.constant dense<0.000000e+00> : vector<256xf32>
    %3 = vector.multi_reduction <add>, %2, %cst [0] : vector<32x256xf32> to vector<256xf32>
    %4 = vector.shape_cast %3 : vector<256xf32> to vector<1x256xf32>
    %cst_2 = arith.constant 1.000000e-24 : f32
    %5 = vector.broadcast %cst_2 : f32 to vector<1x256xf32>
    %6 = arith.maximumf %4, %5 : vector<1x256xf32>
    %7 = math.rsqrt %6 : vector<1x256xf32>
    %8 = vector.broadcast %7 : vector<1x256xf32> to vector<32x256xf32>
    %9 = arith.mulf %1, %8 : vector<32x256xf32>
    %10 = arith.mulf %7, %7 : vector<1x256xf32>
    %11 = arith.mulf %4, %10 : vector<1x256xf32>
    %12 = tpu.concatenate %9, %11 in 0 : vector<32x256xf32>, vector<1x256xf32> -> vector<33x256xf32>
    %c0_3 = arith.constant 0 : index
    %c0_4 = arith.constant 0 : index
    %13 = vector.load %arg3[%c0_3, %c0_4] : memref<64x33xf32, #tpu.memory_space<vmem>>, vector<64x33xf32>
    %cst_5 = arith.constant dense<0.000000e+00> : vector<256x64xf32>
    %14 = tpu.matmul %12, %13, %cst_5 {dimension_numbers = #tpu.dot_dimension_numbers<[0], [1], [1], [0], [0, 1, 1, 0], [], []>} : vector<33x256xf32>, vector<64x33xf32>, vector<256x64xf32> -> vector<256x64xf32>
    %c0_6 = arith.constant 0 : index
    %c0_7 = arith.constant 0 : index
    %15 = vector.load %arg4[%c0_6, %c0_7] : memref<1x64xf32, #tpu.memory_space<vmem>>, vector<1x64xf32>
    %cst_8 = arith.constant 2.000000e+00 : f32
    %16 = vector.broadcast %cst_8 : f32 to vector<256x64xf32>
    %17 = arith.mulf %16, %14 : vector<256x64xf32>
    %18 = vector.broadcast %15 : vector<1x64xf32> to vector<256x64xf32>
    %19 = arith.subf %18, %17 : vector<256x64xf32>
    %cst_9 = arith.constant 0.000000e+00 : f32
    %20 = vector.broadcast %cst_9 : f32 to vector<256x64xf32>
    %21 = arith.maximumf %19, %20 : vector<256x64xf32>
    %22 = math.sqrt %21 : vector<256x64xf32>
    %c0_10 = arith.constant 0 : index
    %c0_11 = arith.constant 0 : index
    %c0_12 = arith.constant 0 : index
    %23 = vector.load %arg5[%c0_10, %c0_11, %c0_12] : memref<1x256x64xf32, #tpu.memory_space<vmem>>, vector<1x256x64xf32>
    %24 = vector.shape_cast %23 : vector<1x256x64xf32> to vector<256x64xf32>
    %25 = vector.shape_cast %22 : vector<256x64xf32> to vector<1x256x64xf32>
    tpu.vector_store %arg5[%c0_10, %c0_11, %c0_12], %25 {strides = array<i32>} : memref<1x256x64xf32, #tpu.memory_space<vmem>>, vector<1x256x64xf32>,
    %cst_13 = arith.constant dense<0x7F800000> : vector<256xf32>
    %26 = vector.multi_reduction <minimumf>, %22, %cst_13 [1] : vector<256x64xf32> to vector<256xf32>
    %27 = vector.shape_cast %26 : vector<256xf32> to vector<256x1xf32>
    %28 = vector.broadcast %27 : vector<256x1xf32> to vector<256x64xf32>
    %29 = arith.subf %22, %28 : vector<256x64xf32>
    %cst_14 = arith.constant -3.200000e+01 : f32
    %30 = vector.broadcast %cst_14 : f32 to vector<256x64xf32>
    %31 = arith.mulf %30, %29 : vector<256x64xf32>
    %32 = math.exp %31 : vector<256x64xf32>
    %cst_15 = arith.constant dense<0.000000e+00> : vector<256xf32>
    %33 = vector.multi_reduction <add>, %32, %cst_15 [1] : vector<256x64xf32> to vector<256xf32>
    %34 = vector.shape_cast %33 : vector<256xf32> to vector<256x1xf32>
    %35 = tpu.reciprocal %34 {approx = true} : vector<256x1xf32> -> vector<256x1xf32>
    %36 = arith.mulf %34, %35 : vector<256x1xf32>
    %cst_16 = arith.constant 2.000000e+00 : f32
    %37 = vector.broadcast %cst_16 : f32 to vector<256x1xf32>
    %38 = arith.subf %37, %36 : vector<256x1xf32>
    %39 = arith.mulf %35, %38 : vector<256x1xf32>
    %40 = vector.broadcast %39 : vector<256x1xf32> to vector<256x64xf32>
    %41 = arith.mulf %32, %40 : vector<256x64xf32>
    %c0_17 = arith.constant 0 : index
    %c0_18 = arith.constant 0 : index
    %c0_19 = arith.constant 0 : index
    %42 = vector.load %arg6[%c0_17, %c0_18, %c0_19] : memref<1x256x64xf32, #tpu.memory_space<vmem>>, vector<1x256x64xf32>
    %43 = vector.shape_cast %42 : vector<1x256x64xf32> to vector<256x64xf32>
    %44 = vector.shape_cast %41 : vector<256x64xf32> to vector<1x256x64xf32>
    tpu.vector_store %arg6[%c0_17, %c0_18, %c0_19], %44 {strides = array<i32>} : memref<1x256x64xf32, #tpu.memory_space<vmem>>, vector<1x256x64xf32>,
    return
  }
  func.func @transform_0(%arg0: i32, %arg1: i32) -> (i32, i32, i32) {
    %c0_i32 = arith.constant 0 : i32
    %c0_i32_0 = arith.constant 0 : i32
    return %arg0, %c0_i32, %arg1 : i32, i32, i32
  }
  func.func @transform_1(%arg0: i32, %arg1: i32) -> (i32, i32) {
    %c0_i32 = arith.constant 0 : i32
    %c0_i32_0 = arith.constant 0 : i32
    %c0_i32_1 = arith.constant 0 : i32
    return %c0_i32, %c0_i32_0 : i32, i32
  }
  func.func @transform_2(%arg0: i32, %arg1: i32) -> (i32, i32) {
    %c0_i32 = arith.constant 0 : i32
    %c0_i32_0 = arith.constant 0 : i32
    %c0_i32_1 = arith.constant 0 : i32
    return %c0_i32, %c0_i32_0 : i32, i32
  }
  func.func @transform_3(%arg0: i32, %arg1: i32) -> (i32, i32, i32) {
    %c0_i32 = arith.constant 0 : i32
    %c0_i32_0 = arith.constant 0 : i32
    return %arg0, %arg1, %c0_i32 : i32, i32, i32
  }
  func.func @transform_4(%arg0: i32, %arg1: i32) -> (i32, i32, i32) {
    %c0_i32 = arith.constant 0 : i32
    %c0_i32_0 = arith.constant 0 : i32
    return %arg0, %arg1, %c0_i32 : i32, i32, i32
  }
}

</mosaic_0001>

<llo_original>
// kernel: tpu_custom_call.1
$region0: #{tpu_custom_call.1}
  #allocation0 [shape = 'u32[]', space=smem, size = 0x4, offset = 0x4, fixed_abs, tag = 'smem constant byte address 0x4 - core index']
  #allocation1 [shape = 'u32[144,128]{1,0:T(1,128)}', space=vmem, size = 0x12000, scoped, tag = 'internal scratch']
  %s0 = inlined_call_operand.hbm [shape: f32[2,32,256], index: 0, kind: input, shape index: {}]
  %s1 = inlined_call_operand.vmem [shape: f32[64,33], index: 1, kind: input, shape index: {}]
  %s2 = inlined_call_operand.vmem [shape: f32[1,64], index: 2, kind: input, shape index: {}]
  %s3 = inlined_call_operand.vmem [shape: f32[2,256,64], index: 3, kind: output, shape index: {0}]
  %s4 = inlined_call_operand.vmem [shape: f32[2,256,64], index: 4, kind: output, shape index: {1}]
  %5 = xla_tuple %s3, %s4
  %s6 = sld [smem:[#allocation0]]
  $region57: #{tpu_custom_call.1} parent=0
    _
  %s8 = ssub.s32 1, %s6
  %s9 = scalar_select 0, %s8, %s6
  $region1: #{tpu_custom_call.1} parent=0
    #allocation2 [shape = 'u8[65536]{0}', space=vmem, size = 0x10000, scoped, tag = 'input window, operand 0']
    #allocation3 [shape = 's32[2]{0}', space=sflag, size = 0x8, scoped, tag = 'scoped memory for tpu_custom_call.1']
    %10 = vsyncpa [#allocation3], 0
    %s11 = scalar_lea.sflag [#allocation3], 1
    %12 = vsyncpa %s11, 0
    loop: start=0, step=1, limit=4
    $region2: #{tpu_custom_call.1} parent=1 // loop_pre_header
      _
    $region3: #{tpu_custom_call.1} parent=1 // loop_header
      %s14 = sphi 0, %s18
      %p15 = scmp.ge.s32.totalorder %s14, 4
      %s21 = sphi 0, %s33
      %s22 = sphi 0, %s29
      %s23 = sphi 0, %s21
      %s24 = sphi 0, %s22
      %s25 = sphi 0, %s23
      %s26 = sphi 0, %s24
      %s38 = sphi 0, %s40
      %s41 = sphi 0, %s38
      %s42 = sphi 0, %s41
      %s58 = sphi 0, %s42
      %s62 = sphi 0, %s62
      %s64 = sphi 0, %s62
      %s65 = sphi 0, %s64
      %s79 = sphi 0, %s65
      %s83 = sphi 0, %s83
      %s85 = sphi 0, %s83
      %s86 = sphi 0, %s85
      %s100 = sphi 0, %s86
      %s108 = sphi 0, %s110
      %s111 = sphi 0, %s108
      %s112 = sphi 0, %s111
      %s128 = sphi 0, %s112
      %s136 = sphi 0, %s138
      %s139 = sphi 0, %s136
      %s140 = sphi 0, %s139
      %s156 = sphi 0, %s140
    $region4: #{tpu_custom_call.1} parent=1 // loop_header_branch
      %17 = sbr.rel (%p15) target = $region8
    $region5: #{tpu_custom_call.1} parent=1 // loop_body
      %s19 = ssub.s32 %s14, 1
      %s20 = ssub.s32 %s14, 2
      %s27 = sadd.s32 1, %s22
      %p28 = scmp.ge.s32.totalorder %s27, 1
      %s29 = scalar_select %p28, 0, %s27
      %s30 = sadd.s32 1, %s21
      %s31 = scalar_select %p28, %s30, %s21
      %p32 = scmp.ge.s32.totalorder %s31, 2
      %s33 = scalar_select %p32, 0, %s31
      %s34 = ssub.s32 %s21, %s33
      %s35 = ssub.s32 %s22, %s29
      %s36 = sor.u32 %s34, %s35
      %p37 = scmp.eq.s32.totalorder %s36, 0
      %s39 = sadd.s32 %s38, 1
      %s40 = scalar_select %p37, %s38, %s39
      %p43 = pneg %p37
      %p44 = scmp.eq.s32.totalorder %s14, 1
      %p45 = por %p43, %p44
      %p46 = scmp.ne.s32.totalorder %s38, %s41
      %p47 = scmp.eq.s32.totalorder %s14, 0
      %p48 = por %p46, %p47
      %p49 = scmp.ne.s32.totalorder %s38, %s41
      %p50 = scmp.eq.s32.totalorder %s19, 1
      %p51 = por %p49, %p50
      %p52 = scmp.ne.s32.totalorder %s41, %s42
      %p53 = scmp.eq.s32.totalorder %s19, 0
      %p54 = por %p52, %p53
      %p55 = scmp.ne.s32.totalorder %s41, %s42
      %p56 = scmp.eq.s32.totalorder %s20, 1
      %p57 = por %p55, %p56
      %p59 = scmp.ne.s32.totalorder %s42, %s58
      %p60 = scmp.eq.s32.totalorder %s20, 0
      %p61 = por %p59, %p60
      %s63 = sadd.s32 %s62, 1
      %p66 = scmp.eq.s32.totalorder %s14, 1
      %p67 = scmp.ne.s32.totalorder %s62, %s64
      %p68 = scmp.eq.s32.totalorder %s14, 0
      %p69 = por %p67, %p68
      %p70 = scmp.ne.s32.totalorder %s62, %s64
      %p71 = scmp.eq.s32.totalorder %s19, 1
      %p72 = por %p70, %p71
      %p73 = scmp.ne.s32.totalorder %s64, %s65
      %p74 = scmp.eq.s32.totalorder %s19, 0
      %p75 = por %p73, %p74
      %p76 = scmp.ne.s32.totalorder %s64, %s65
      %p77 = scmp.eq.s32.totalorder %s20, 1
      %p78 = por %p76, %p77
      %p80 = scmp.ne.s32.totalorder %s65, %s79
      %p81 = scmp.eq.s32.totalorder %s20, 0
      %p82 = por %p80, %p81
      %s84 = sadd.s32 %s83, 1
      %p87 = scmp.eq.s32.totalorder %s14, 1
      %p88 = scmp.ne.s32.totalorder %s83, %s85
      %p89 = scmp.eq.s32.totalorder %s14, 0
      %p90 = por %p88, %p89
      %p91 = scmp.ne.s32.totalorder %s83, %s85
      %p92 = scmp.eq.s32.totalorder %s19, 1
      %p93 = por %p91, %p92
      %p94 = scmp.ne.s32.totalorder %s85, %s86
      %p95 = scmp.eq.s32.totalorder %s19, 0
      %p96 = por %p94, %p95
      %p97 = scmp.ne.s32.totalorder %s85, %s86
      %p98 = scmp.eq.s32.totalorder %s20, 1
      %p99 = por %p97, %p98
      %p101 = scmp.ne.s32.totalorder %s86, %s100
      %p102 = scmp.eq.s32.totalorder %s20, 0
      %p103 = por %p101, %p102
      %s104 = ssub.s32 %s21, %s33
      %s105 = ssub.s32 %s22, %s29
      %s106 = sor.u32 %s104, %s105
      %p107 = scmp.eq.s32.totalorder %s106, 0
      %s109 = sadd.s32 %s108, 1
      %s110 = scalar_select %p107, %s108, %s109
      %p113 = pneg %p107
      %p114 = scmp.eq.s32.totalorder %s14, 1
      %p115 = por %p113, %p114
      %p116 = scmp.ne.s32.totalorder %s108, %s111
      %p117 = scmp.eq.s32.totalorder %s14, 0
      %p118 = por %p116, %p117
      %p119 = scmp.ne.s32.totalorder %s108, %s111
      %p120 = scmp.eq.s32.totalorder %s19, 1
      %p121 = por %p119, %p120
      %p122 = scmp.ne.s32.totalorder %s111, %s112
      %p123 = scmp.eq.s32.totalorder %s19, 0
      %p124 = por %p122, %p123
      %p125 = scmp.ne.s32.totalorder %s111, %s112
      %p126 = scmp.eq.s32.totalorder %s20, 1
      %p127 = por %p125, %p126
      %p129 = scmp.ne.s32.totalorder %s112, %s128
      %p130 = scmp.eq.s32.totalorder %s20, 0
      %p131 = por %p129, %p130
      %s132 = ssub.s32 %s21, %s33
      %s133 = ssub.s32 %s22, %s29
      %s134 = sor.u32 %s132, %s133
      %p135 = scmp.eq.s32.totalorder %s134, 0
      %s137 = sadd.s32 %s136, 1
      %s138 = scalar_select %p135, %s136, %s137
      %p141 = pneg %p135
      %p142 = scmp.eq.s32.totalorder %s14, 1
      %p143 = por %p141, %p142
      %p144 = scmp.ne.s32.totalorder %s136, %s139
      %p145 = scmp.eq.s32.totalorder %s14, 0
      %p146 = por %p144, %p145
      %p147 = scmp.ne.s32.totalorder %s136, %s139
      %p148 = scmp.eq.s32.totalorder %s19, 1
      %p149 = por %p147, %p148
      %p150 = scmp.ne.s32.totalorder %s139, %s140
      %p151 = scmp.eq.s32.totalorder %s19, 0
      %p152 = por %p150, %p151
      %p153 = scmp.ne.s32.totalorder %s139, %s140
      %p154 = scmp.eq.s32.totalorder %s20, 1
      %p155 = por %p153, %p154
      %p157 = scmp.ne.s32.totalorder %s140, %s156
      %p158 = scmp.eq.s32.totalorder %s20, 0
      %p159 = por %p157, %p158
      %p160 = scmp.le.s32.totalorder 1, %s14
      %p161 = scmp.lt.s32.totalorder %s14, 3
      %p162 = pnand %p160, %p161
      %p163 = pneg %p162
      // Predicated region
      $region9: #{tpu_custom_call.1} parent=5 // pred_check
        _
      $region10: #{tpu_custom_call.1} parent=5 // pred_check_branch
        %165 = sbr.rel (%p162) target = $region12
      $region11: #{tpu_custom_call.1} parent=5 // pred_region
        %s166 = ssub.s32 %s14, 1
        // Predicated region
        $region13: #{tpu_custom_call.1} parent=11 // pred_check
          %p167 = pneg %p75
        $region14: #{tpu_custom_call.1} parent=11 // pred_check_branch
          %169 = sbr.rel (%p167) target = $region16
        $region15: #{tpu_custom_call.1} parent=11 // pred_region
          _
        $region16: #{tpu_custom_call.1} parent=11 // pred_fallthru
          _
        // Predicated region
        $region17: #{tpu_custom_call.1} parent=11 // pred_check
          %p170 = pneg %p96
        $region18: #{tpu_custom_call.1} parent=11 // pred_check_branch
          %172 = sbr.rel (%p170) target = $region20
        $region19: #{tpu_custom_call.1} parent=11 // pred_region
          _
        $region20: #{tpu_custom_call.1} parent=11 // pred_fallthru
          _
      $region12: #{tpu_custom_call.1} parent=5 // pred_fallthru
        _
      %p173 = scmp.lt.s32.totalorder %s14, 2
      // Predicated region
      $region21: #{tpu_custom_call.1} parent=5 // pred_check
        %p174 = pneg %p173
      $region22: #{tpu_custom_call.1} parent=5 // pred_check_branch
        %176 = sbr.rel (%p174) target = $region24
      $region23: #{tpu_custom_call.1} parent=5 // pred_region
        // Predicated region
        $region25: #{tpu_custom_call.1} parent=23 // pred_check
          %p177 = pneg %p48
        $region26: #{tpu_custom_call.1} parent=23 // pred_check_branch
          %179 = sbr.rel (%p177) target = $region28
        $region27: #{tpu_custom_call.1} parent=23 // pred_region
          %s180 = sand.u32 %s38, 1
          %s181 = scalar_lea.sflag [#allocation3], %s180
          %s182 = sand.u32 %s38, 1
          %s183 = smul.addr %s182, 64
          %s184 = scalar_lea.vmem [#allocation2], %s183
          %s185 = smul.u32 2, %s22
          %s187 = ssub.s32 1024, 1024
          %188 = vsyncadd %s181, %s187
          %s189 = smul.addr %s21, 8
          %s190 = sadd.s32 %s185, %s189
          %s191 = smul.addr %s190, 128
          %s192 = scalar_lea.hbm %s0, %s191
          %s193 = sshll.u32 %s184, 4
          %s194 = int_to_ptr.vmem [resolvable:$true] %s193
          %199 = dma.hbm_to_vmem [thread:$0]  %s192, 1024, %s194, %s181, 256, 256, 16
        $region28: #{tpu_custom_call.1} parent=23 // pred_fallthru
          _
      $region24: #{tpu_custom_call.1} parent=5 // pred_fallthru
        _
      %p200 = scmp.le.s32.totalorder 1, %s14
      %p201 = scmp.lt.s32.totalorder %s14, 3
      %p202 = pnand %p200, %p201
      %p203 = pneg %p202
      // Predicated region
      $region29: #{tpu_custom_call.1} parent=5 // pred_check
        _
      $region30: #{tpu_custom_call.1} parent=5 // pred_check_branch
        %205 = sbr.rel (%p202) target = $region32
      $region31: #{tpu_custom_call.1} parent=5 // pred_region
        %s206 = ssub.s32 %s14, 1
        %s207 = sand.u32 %s41, 1
        %s208 = scalar_lea.sflag [#allocation3], %s207
        %s209 = sand.u32 %s41, 1
        %s210 = smul.addr %s209, 64
        %s211 = scalar_lea.vmem [#allocation2], %s210
        // Predicated region
        $region33: #{tpu_custom_call.1} parent=31 // pred_check
          %p212 = pneg %p54
        $region34: #{tpu_custom_call.1} parent=31 // pred_check_branch
          %214 = sbr.rel (%p212) target = $region36
        $region35: #{tpu_custom_call.1} parent=31 // pred_region
          %215 = dma.done %s208, 1024
        $region36: #{tpu_custom_call.1} parent=31 // pred_fallthru
          _
        %s216 = sand.u32 %s41, 1
        %s217 = scalar_lea.sflag [#allocation3], %s216
        %s218 = sand.u32 %s41, 1
        %s219 = smul.addr %s218, 64
        %s220 = scalar_lea.vmem [#allocation2], %s219
        %p221 = pneg %p54
        %p222 = pneg %p51
        %p223 = pneg %p75
        %p224 = pneg %p72
        %p225 = pneg %p96
        %p226 = pneg %p93
        %p227 = pneg %p124
        %p228 = pneg %p121
        %s229 = smul.u32 32, %s24
        %p230 = scmp.lt.s32.totalorder %s23, 1
        %s231 = scalar_select %p230, %s23, 1
        %p232 = scmp.lt.s32.totalorder %s229, 31
        %s233 = scalar_select %p232, %s229, 31
        %s234 = smul.addr %s231, 32
        %s235 = sadd.s32 %s233, %s234
        %s236 = smul.addr %s235, 8
        %s237 = scalar_lea.vmem %s3, %s236
        %p238 = pneg %p152
        %p239 = pneg %p149
        %s240 = smul.u32 32, %s24
        %p241 = scmp.lt.s32.totalorder %s23, 1
        %s242 = scalar_select %p241, %s23, 1
        %p243 = scmp.lt.s32.totalorder %s240, 31
        %s244 = scalar_select %p243, %s240, 31
        %s245 = smul.addr %s242, 32
        %s246 = sadd.s32 %s244, %s245
        %s247 = smul.addr %s246, 8
        %s248 = scalar_lea.vmem %s4, %s247
        %s249 = smul.u32 2, %s24
        %s250 = smul.u32 32, %s24
        %p251 = scmp.lt.s32.totalorder %s23, 1
        %s252 = scalar_select %p251, %s23, 1
        %p253 = scmp.lt.s32.totalorder %s250, 31
        %s254 = scalar_select %p253, %s250, 31
        %s255 = smul.addr %s252, 32
        %s256 = sadd.s32 %s254, %s255
        %s257 = smul.addr %s256, 8
        %s258 = scalar_lea.vmem %s3, %s257
        %s259 = smul.u32 32, %s24
        %s260 = smul.u32 32, %s24
        %p261 = scmp.lt.s32.totalorder %s23, 1
        %s262 = scalar_select %p261, %s23, 1
        %p263 = scmp.lt.s32.totalorder %s260, 31
        %s264 = scalar_select %p263, %s260, 31
        %s265 = smul.addr %s262, 32
        %s266 = sadd.s32 %s264, %s265
        %s267 = smul.addr %s266, 8
        %s268 = scalar_lea.vmem %s4, %s267
        %s269 = smul.u32 32, %s24
        %v270 = vld [vmem:[%s211] sm:$0xff]
        %v271 = vld [vmem:[%s211 + $0x8] sm:$0xff]
        %v272 = vld [vmem:[%s211 + $0x10] sm:$0xff]
        %v273 = vld [vmem:[%s211 + $0x18] sm:$0xff]
        %v274 = vld [vmem:[%s211 + $0x20] sm:$0xff]
        %v275 = vld [vmem:[%s211 + $0x28] sm:$0xff]
        %v276 = vld [vmem:[%s211 + $0x30] sm:$0xff]
        %v277 = vld [vmem:[%s211 + $0x38] sm:$0xff]
        %v278 = vmul.f32 %v270, %v270
        %v279 = vmul.f32 %v271, %v271
        %v280 = vmul.f32 %v272, %v272
        %v281 = vmul.f32 %v273, %v273
        %v282 = vmul.f32 %v274, %v274
        %v283 = vmul.f32 %v275, %v275
        %v284 = vmul.f32 %v276, %v276
        %v285 = vmul.f32 %v277, %v277
        %v286 = vadd.f32 %v278, %v280
        %v287 = vadd.f32 %v286, %v282
        %v288 = vadd.f32 %v287, %v284
        %v289 = vrot.slane %v288, 4
        %v290 = vadd.f32 %v288, %v289
        %v291 = vrot.slane %v290, 2
        %v292 = vadd.f32 %v290, %v291
        %v293 = vrot.slane %v292, 1
        %v294 = vadd.f32 %v292, %v293
        %v295 = vadd.f32 %v279, %v281
        %v296 = vadd.f32 %v295, %v283
        %v297 = vadd.f32 %v296, %v285
        %v298 = vrot.slane %v297, 4
        %v299 = vadd.f32 %v297, %v298
        %v300 = vrot.slane %v299, 2
        %v301 = vadd.f32 %v299, %v300
        %v302 = vrot.slane %v301, 1
        %v303 = vadd.f32 %v301, %v302
        %v304 = vmax.f32 %v294, 1e-24
        %v305 = vmax.f32 %v303, 1e-24
        %v306 = vrsqrt.pop %v304
        %v307 = vrsqrt.pop %v305
        %v308 = vmul.f32 %v270, %v306
        %v309 = vmul.f32 %v271, %v307
        %v310 = vmul.f32 %v272, %v306
        %v311 = vmul.f32 %v273, %v307
        %v312 = vmul.f32 %v274, %v306
        %v313 = vmul.f32 %v275, %v307
        %v314 = vmul.f32 %v276, %v306
        %v315 = vmul.f32 %v277, %v307
        %v316 = vmul.f32 %v306, %v306
        %v317 = vmul.f32 %v307, %v307
        %v318 = vmul.f32 %v294, %v316
        %v319 = vmul.f32 %v303, %v317
        %v320 = vld [vmem:[%s1] sm:$0xff]
        %v321 = vld [vmem:[%s1 + $0x8] sm:$0xff]
        %v322 = vld [vmem:[%s1 + $0x10] sm:$0xff]
        %v323 = vld [vmem:[%s1 + $0x18] sm:$0xff]
        %v324 = vld [vmem:[%s1 + $0x20] sm:$0xff]
        %v325 = vld [vmem:[%s1 + $0x28] sm:$0xff]
        %v326 = vld [vmem:[%s1 + $0x30] sm:$0xff]
        %v327 = vld [vmem:[%s1 + $0x38] sm:$0xff]
        %328 = vxpose.xlu0.b32.start [1/16] %v308, 128
        %329 = vxpose.xlu0.b32.cont [2/16] %v310, 128
        %330 = vxpose.xlu0.b32.cont [3/16] %v312, 128
        %331 = vxpose.xlu0.b32.cont [4/16] %v314, 128
        %332 = vxpose.xlu0.b32.cont [5/16] %v318, 128
        %333 = vxpose.xlu0.b32.cont [6/16] 0.0, 128
        %334 = vxpose.xlu0.b32.cont [7/16] 0.0, 128
        %335 = vxpose.xlu0.b32.cont [8/16] 0.0, 128
        %336 = vxpose.xlu0.b32.cont [9/16] 0.0, 128
        %337 = vxpose.xlu0.b32.cont [10/16] 0.0, 128
        %338 = vxpose.xlu0.b32.cont [11/16] 0.0, 128
        %339 = vxpose.xlu0.b32.cont [12/16] 0.0, 128
        %340 = vxpose.xlu0.b32.cont [13/16] 0.0, 128
        %341 = vxpose.xlu0.b32.cont [14/16] 0.0, 128
        %342 = vxpose.xlu0.b32.cont [15/16] 0.0, 128
        %343 = vxpose.xlu0.b32.end [16/16] 0.0, 128
        %v344 = vpop.trf.xlu0
        %v345 = vpop.trf.xlu0
        %v346 = vpop.trf.xlu0
        %v347 = vpop.trf.xlu0
        %v348 = vpop.trf.xlu0
        %v349 = vpop.trf.xlu0
        %v350 = vpop.trf.xlu0
        %v351 = vpop.trf.xlu0
        %v352 = vpop.trf.xlu0
        %v353 = vpop.trf.xlu0
        %v354 = vpop.trf.xlu0
        %v355 = vpop.trf.xlu0
        %v356 = vpop.trf.xlu0
        %v357 = vpop.trf.xlu0
        %v358 = vpop.trf.xlu0
        %v359 = vpop.trf.xlu0
        %360 = vxpose.xlu0.b32.start [1/16] %v309, 128
        %361 = vxpose.xlu0.b32.cont [2/16] %v311, 128
        %362 = vxpose.xlu0.b32.cont [3/16] %v313, 128
        %363 = vxpose.xlu0.b32.cont [4/16] %v315, 128
        %364 = vxpose.xlu0.b32.cont [5/16] %v319, 128
        %365 = vxpose.xlu0.b32.cont [6/16] 0.0, 128
        %366 = vxpose.xlu0.b32.cont [7/16] 0.0, 128
        %367 = vxpose.xlu0.b32.cont [8/16] 0.0, 128
        %368 = vxpose.xlu0.b32.cont [9/16] 0.0, 128
        %369 = vxpose.xlu0.b32.cont [10/16] 0.0, 128
        %370 = vxpose.xlu0.b32.cont [11/16] 0.0, 128
        %371 = vxpose.xlu0.b32.cont [12/16] 0.0, 128
        %372 = vxpose.xlu0.b32.cont [13/16] 0.0, 128
        %373 = vxpose.xlu0.b32.cont [14/16] 0.0, 128
        %374 = vxpose.xlu0.b32.cont [15/16] 0.0, 128
        %375 = vxpose.xlu0.b32.end [16/16] 0.0, 128
        %v376 = vpop.trf.xlu0
        %v377 = vpop.trf.xlu0
        %v378 = vpop.trf.xlu0
        %v379 = vpop.trf.xlu0
        %v380 = vpop.trf.xlu0
        %v381 = vpop.trf.xlu0
        %v382 = vpop.trf.xlu0
        %v383 = vpop.trf.xlu0
        %v384 = vpop.trf.xlu0
        %v385 = vpop.trf.xlu0
        %v386 = vpop.trf.xlu0
        %v387 = vpop.trf.xlu0
        %v388 = vpop.trf.xlu0
        %v389 = vpop.trf.xlu0
        %v390 = vpop.trf.xlu0
        %v391 = vpop.trf.xlu0
        %vm392 = vcmask 269312
        %v394 = vsel %vm392, %v344, 0
        %v397 = vsel %vm392, %v345, 0
        %v400 = vsel %vm392, %v346, 0
        %v403 = vsel %vm392, %v347, 0
        %v406 = vsel %vm392, %v348, 0
        %v409 = vsel %vm392, %v349, 0
        %v412 = vsel %vm392, %v350, 0
        %v415 = vsel %vm392, %v351, 0
        %v418 = vsel %vm392, %v352, 0
        %v421 = vsel %vm392, %v353, 0
        %v424 = vsel %vm392, %v354, 0
        %v427 = vsel %vm392, %v355, 0
        %v430 = vsel %vm392, %v356, 0
        %v433 = vsel %vm392, %v357, 0
        %v436 = vsel %vm392, %v358, 0
        %v439 = vsel %vm392, %v359, 0
        %v442 = vsel %vm392, %v376, 0
        %v445 = vsel %vm392, %v377, 0
        %v448 = vsel %vm392, %v378, 0
        %v451 = vsel %vm392, %v379, 0
        %v454 = vsel %vm392, %v380, 0
        %v457 = vsel %vm392, %v381, 0
        %v460 = vsel %vm392, %v382, 0
        %v463 = vsel %vm392, %v383, 0
        %v466 = vsel %vm392, %v384, 0
        %v469 = vsel %vm392, %v385, 0
        %v472 = vsel %vm392, %v386, 0
        %v475 = vsel %vm392, %v387, 0
        %v478 = vsel %vm392, %v388, 0
        %v481 = vsel %vm392, %v389, 0
        %v484 = vsel %vm392, %v390, 0
        %v487 = vsel %vm392, %v391, 0
        %v490 = vsel %vm392, %v320, 0
        %v493 = vsel %vm392, %v321, 0
        %v496 = vsel %vm392, %v322, 0
        %v499 = vsel %vm392, %v323, 0
        %v502 = vsel %vm392, %v324, 0
        %v505 = vsel %vm392, %v325, 0
        %v508 = vsel %vm392, %v326, 0
        %v511 = vsel %vm392, %v327, 0
        %513 = vmatprep.subr.mxu0 0.0
        %514 = vmatpush1.xpose.msra.mxu0 %v490
        %515 = vmatprep.subr.mxu0 0.0
        %516 = vmatpush1.xpose.msra.mxu0 %v493
        %517 = vmatprep.subr.mxu0 0.0
        %518 = vmatpush1.xpose.msra.mxu0 %v496
        %519 = vmatprep.subr.mxu0 0.0
        %520 = vmatpush1.xpose.msra.mxu0 %v499
        %521 = vmatprep.subr.mxu0 0.0
        %522 = vmatpush1.xpose.msra.mxu0 %v502
        %523 = vmatprep.subr.mxu0 0.0
        %524 = vmatpush1.xpose.msra.mxu0 %v505
        %525 = vmatprep.subr.mxu0 0.0
        %526 = vmatpush1.xpose.msra.mxu0 %v508
        %527 = vmatprep.subr.mxu0 0.0
        %528 = vmatpush1.xpose.msra.mxu0 %v511
        %529 = vmatprep.subr.mxu0 0.0
        %530 = vmatpush1.xpose.msra.mxu0 0.0
        %531 = vmatprep.subr.mxu0 0.0
        %532 = vmatpush1.xpose.msra.mxu0 0.0
        %533 = vmatprep.subr.mxu0 0.0
        %534 = vmatpush1.xpose.msra.mxu0 0.0
        %535 = vmatprep.subr.mxu0 0.0
        %536 = vmatpush1.xpose.msra.mxu0 0.0
        %537 = vmatprep.subr.mxu0 0.0
        %538 = vmatpush1.xpose.msra.mxu0 0.0
        %539 = vmatprep.subr.mxu0 0.0
        %540 = vmatpush1.xpose.msra.mxu0 0.0
        %541 = vmatprep.subr.mxu0 0.0
        %542 = vmatpush1.xpose.msra.mxu0 0.0
        %543 = vmatprep.subr.mxu0 0.0
        %544 = vmatpush1.xpose.msra.mxu0 0.0
        %545 = vmatprep.subr.mxu0 0.0
        %546 = vmatpush1.xpose.msra.mxu0 0.0
        %547 = vmatprep.subr.mxu0 0.0
        %548 = vmatpush1.xpose.msra.mxu0 0.0
        %549 = vmatprep.subr.mxu0 0.0
        %550 = vmatpush1.xpose.msra.mxu0 0.0
        %551 = vmatprep.subr.mxu0 0.0
        %552 = vmatpush1.xpose.msra.mxu0 0.0
        %553 = vmatprep.subr.mxu0 0.0
        %554 = vmatpush1.xpose.msra.mxu0 0.0
        %555 = vmatprep.subr.mxu0 0.0
        %556 = vmatpush1.xpose.msra.mxu0 0.0
        %557 = vmatprep.subr.mxu0 0.0
        %558 = vmatpush1.xpose.msra.mxu0 0.0
        %559 = vmatprep.subr.mxu0 0.0
        %560 = vmatpush1.xpose.msra.mxu0 0.0
        %561 = vmatprep.subr.mxu0 0.0
        %562 = vmatpush1.xpose.msra.mxu0 0.0
        %563 = vmatprep.subr.mxu0 0.0
        %564 = vmatpush1.xpose.msra.mxu0 0.0
        %565 = vmatprep.subr.mxu0 0.0
        %566 = vmatpush1.xpose.msra.mxu0 0.0
        %567 = vmatprep.subr.mxu0 0.0
        %568 = vmatpush1.xpose.msra.mxu0 0.0
        %569 = vmatprep.subr.mxu0 0.0
        %570 = vmatpush1.xpose.msra.mxu0 0.0
        %571 = vmatprep.subr.mxu0 0.0
        %572 = vmatpush1.xpose.msra.mxu0 0.0
        %573 = vmatprep.subr.mxu0 0.0
        %574 = vmatpush1.xpose.msra.mxu0 0.0
        %575 = vmatprep.subr.mxu0 0.0
        %576 = vmatpush1.xpose.msra.mxu0 0.0
        %577 = vmatprep.mubr.f32.mxu0 0.0
        %578 = vmatmul.mubr.f32.gmra.mrb[0].mxu0 %v394
        %v579 = vpop.f32.mrb[0].mxu0
        %v580 = vadd.f32 0.0, %v579
        %v581 = vpop.f32.mrb[0].mxu0
        %582 = vmatprep.mubr.f32.mxu0 0.0
        %583 = vmatmul.mubr.f32.gmra.mrb[0].mxu0 %v397
        %v584 = vpop.f32.mrb[0].mxu0
        %v585 = vadd.f32 0.0, %v584
        %v586 = vpop.f32.mrb[0].mxu0
        %587 = vmatprep.mubr.f32.mxu0 0.0
        %588 = vmatmul.mubr.f32.gmra.mrb[0].mxu0 %v400
        %v589 = vpop.f32.mrb[0].mxu0
        %v590 = vadd.f32 0.0, %v589
        %v591 = vpop.f32.mrb[0].mxu0
        %592 = vmatprep.mubr.f32.mxu0 0.0
        %593 = vmatmul.mubr.f32.gmra.mrb[0].mxu0 %v403
        %v594 = vpop.f32.mrb[0].mxu0
        %v595 = vadd.f32 0.0, %v594
        %v596 = vpop.f32.mrb[0].mxu0
        %597 = vmatprep.mubr.f32.mxu0 0.0
        %598 = vmatmul.mubr.f32.gmra.mrb[0].mxu0 %v406
        %v599 = vpop.f32.mrb[0].mxu0
        %v600 = vadd.f32 0.0, %v599
        %v601 = vpop.f32.mrb[0].mxu0
        %602 = vmatprep.mubr.f32.mxu0 0.0
        %603 = vmatmul.mubr.f32.gmra.mrb[0].mxu0 %v409
        %v604 = vpop.f32.mrb[0].mxu0
        %v605 = vadd.f32 0.0, %v604
        %v606 = vpop.f32.mrb[0].mxu0
        %607 = vmatprep.mubr.f32.mxu0 0.0
        %608 = vmatmul.mubr.f32.gmra.mrb[0].mxu0 %v412
        %v609 = vpop.f32.mrb[0].mxu0
        %v610 = vadd.f32 0.0, %v609
        %v611 = vpop.f32.mrb[0].mxu0
        %612 = vmatprep.mubr.f32.mxu0 0.0
        %613 = vmatmul.mubr.f32.gmra.mrb[0].mxu0 %v415
        %v614 = vpop.f32.mrb[0].mxu0
        %v615 = vadd.f32 0.0, %v614
        %v616 = vpop.f32.mrb[0].mxu0
        %617 = vmatprep.mubr.f32.mxu0 0.0
        %618 = vmatmul.mubr.f32.gmra.mrb[0].mxu0 %v418
        %v619 = vpop.f32.mrb[0].mxu0
        %v620 = vadd.f32 0.0, %v619
        %v621 = vpop.f32.mrb[0].mxu0
        %622 = vmatprep.mubr.f32.mxu0 0.0
        %623 = vmatmul.mubr.f32.gmra.mrb[0].mxu0 %v421
        %v624 = vpop.f32.mrb[0].mxu0
        %v625 = vadd.f32 0.0, %v624
        %v626 = vpop.f32.mrb[0].mxu0
        %627 = vmatprep.mubr.f32.mxu0 0.0
        %628 = vmatmul.mubr.f32.gmra.mrb[0].mxu0 %v424
        %v629 = vpop.f32.mrb[0].mxu0
        %v630 = vadd.f32 0.0, %v629
        %v631 = vpop.f32.mrb[0].mxu0
        %632 = vmatprep.mubr.f32.mxu0 0.0
        %633 = vmatmul.mubr.f32.gmra.mrb[0].mxu0 %v427
        %v634 = vpop.f32.mrb[0].mxu0
        %v635 = vadd.f32 0.0, %v634
        %v636 = vpop.f32.mrb[0].mxu0
        %637 = vmatprep.mubr.f32.mxu0 0.0
        %638 = vmatmul.mubr.f32.gmra.mrb[0].mxu0 %v430
        %v639 = vpop.f32.mrb[0].mxu0
        %v640 = vadd.f32 0.0, %v639
        %v641 = vpop.f32.mrb[0].mxu0
        %642 = vmatprep.mubr.f32.mxu0 0.0
        %643 = vmatmul.mubr.f32.gmra.mrb[0].mxu0 %v433
        %v644 = vpop.f32.mrb[0].mxu0
        %v645 = vadd.f32 0.0, %v644
        %v646 = vpop.f32.mrb[0].mxu0
        %647 = vmatprep.mubr.f32.mxu0 0.0
        %648 = vmatmul.mubr.f32.gmra.mrb[0].mxu0 %v436
        %v649 = vpop.f32.mrb[0].mxu0
        %v650 = vadd.f32 0.0, %v649
        %v651 = vpop.f32.mrb[0].mxu0
        %652 = vmatprep.mubr.f32.mxu0 0.0
        %653 = vmatmul.mubr.f32.gmra.mrb[0].mxu0 %v439
        %v654 = vpop.f32.mrb[0].mxu0
        %v655 = vadd.f32 0.0, %v654
        %v656 = vpop.f32.mrb[0].mxu0
        %657 = vmatprep.mubr.f32.mxu0 0.0
        %658 = vmatmul.mubr.f32.gmra.mrb[0].mxu0 %v442
        %v659 = vpop.f32.mrb[0].mxu0
        %v660 = vadd.f32 0.0, %v659
        %v661 = vpop.f32.mrb[0].mxu0
        %662 = vmatprep.mubr.f32.mxu0 0.0
        %663 = vmatmul.mubr.f32.gmra.mrb[0].mxu0 %v445
        %v664 = vpop.f32.mrb[0].mxu0
        %v665 = vadd.f32 0.0, %v664
        %v666 = vpop.f32.mrb[0].mxu0
        %667 = vmatprep.mubr.f32.mxu0 0.0
        %668 = vmatmul.mubr.f32.gmra.mrb[0].mxu0 %v448
        %v669 = vpop.f32.mrb[0].mxu0
        %v670 = vadd.f32 0.0, %v669
        %v671 = vpop.f32.mrb[0].mxu0
        %672 = vmatprep.mubr.f32.mxu0 0.0
        %673 = vmatmul.mubr.f32.gmra.mrb[0].mxu0 %v451
        %v674 = vpop.f32.mrb[0].mxu0
        %v675 = vadd.f32 0.0, %v674
        %v676 = vpop.f32.mrb[0].mxu0
        %677 = vmatprep.mubr.f32.mxu0 0.0
        %678 = vmatmul.mubr.f32.gmra.mrb[0].mxu0 %v454
        %v679 = vpop.f32.mrb[0].mxu0
        %v680 = vadd.f32 0.0, %v679
        %v681 = vpop.f32.mrb[0].mxu0
        %682 = vmatprep.mubr.f32.mxu0 0.0
        %683 = vmatmul.mubr.f32.gmra.mrb[0].mxu0 %v457
        %v684 = vpop.f32.mrb[0].mxu0
        %v685 = vadd.f32 0.0, %v684
        %v686 = vpop.f32.mrb[0].mxu0
        %687 = vmatprep.mubr.f32.mxu0 0.0
        %688 = vmatmul.mubr.f32.gmra.mrb[0].mxu0 %v460
        %v689 = vpop.f32.mrb[0].mxu0
        %v690 = vadd.f32 0.0, %v689
        %v691 = vpop.f32.mrb[0].mxu0
        %692 = vmatprep.mubr.f32.mxu0 0.0
        %693 = vmatmul.mubr.f32.gmra.mrb[0].mxu0 %v463
        %v694 = vpop.f32.mrb[0].mxu0
        %v695 = vadd.f32 0.0, %v694
        %v696 = vpop.f32.mrb[0].mxu0
        %697 = vmatprep.mubr.f32.mxu0 0.0
        %698 = vmatmul.mubr.f32.gmra.mrb[0].mxu0 %v466
        %v699 = vpop.f32.mrb[0].mxu0
        %v700 = vadd.f32 0.0, %v699
        %v701 = vpop.f32.mrb[0].mxu0
        %702 = vmatprep.mubr.f32.mxu0 0.0
        %703 = vmatmul.mubr.f32.gmra.mrb[0].mxu0 %v469
        %v704 = vpop.f32.mrb[0].mxu0
        %v705 = vadd.f32 0.0, %v704
        %v706 = vpop.f32.mrb[0].mxu0
        %707 = vmatprep.mubr.f32.mxu0 0.0
        %708 = vmatmul.mubr.f32.gmra.mrb[0].mxu0 %v472
        %v709 = vpop.f32.mrb[0].mxu0
        %v710 = vadd.f32 0.0, %v709
        %v711 = vpop.f32.mrb[0].mxu0
        %712 = vmatprep.mubr.f32.mxu0 0.0
        %713 = vmatmul.mubr.f32.gmra.mrb[0].mxu0 %v475
        %v714 = vpop.f32.mrb[0].mxu0
        %v715 = vadd.f32 0.0, %v714
        %v716 = vpop.f32.mrb[0].mxu0
        %717 = vmatprep.mubr.f32.mxu0 0.0
        %718 = vmatmul.mubr.f32.gmra.mrb[0].mxu0 %v478
        %v719 = vpop.f32.mrb[0].mxu0
        %v720 = vadd.f32 0.0, %v719
        %v721 = vpop.f32.mrb[0].mxu0
        %722 = vmatprep.mubr.f32.mxu0 0.0
        %723 = vmatmul.mubr.f32.gmra.mrb[0].mxu0 %v481
        %v724 = vpop.f32.mrb[0].mxu0
        %v725 = vadd.f32 0.0, %v724
        %v726 = vpop.f32.mrb[0].mxu0
        %727 = vmatprep.mubr.f32.mxu0 0.0
        %728 = vmatmul.mubr.f32.gmra.mrb[0].mxu0 %v484
        %v729 = vpop.f32.mrb[0].mxu0
        %v730 = vadd.f32 0.0, %v729
        %v731 = vpop.f32.mrb[0].mxu0
        %732 = vmatprep.mubr.f32.mxu0 0.0
        %733 = vmatmul.mubr.f32.gmra.mrb[0].mxu0 %v487
        %v734 = vpop.f32.mrb[0].mxu0
        %v735 = vadd.f32 0.0, %v734
        %v736 = vpop.f32.mrb[0].mxu0
        %737 = vdwg.mxu0
        %v738 = vld [vmem:[%s2] sm:$0x1]
        %v739 = vmul.f32 %v580, 2.0
        %v740 = vmul.f32 %v585, 2.0
        %v741 = vmul.f32 %v590, 2.0
        %v742 = vmul.f32 %v595, 2.0
        %v743 = vmul.f32 %v600, 2.0
        %v744 = vmul.f32 %v605, 2.0
        %v745 = vmul.f32 %v610, 2.0
        %v746 = vmul.f32 %v615, 2.0
        %v747 = vmul.f32 %v620, 2.0
        %v748 = vmul.f32 %v625, 2.0
        %v749 = vmul.f32 %v630, 2.0
        %v750 = vmul.f32 %v635, 2.0
        %v751 = vmul.f32 %v640, 2.0
        %v752 = vmul.f32 %v645, 2.0
        %v753 = vmul.f32 %v650, 2.0
        %v754 = vmul.f32 %v655, 2.0
        %v755 = vmul.f32 %v660, 2.0
        %v756 = vmul.f32 %v665, 2.0
        %v757 = vmul.f32 %v670, 2.0
        %v758 = vmul.f32 %v675, 2.0
        %v759 = vmul.f32 %v680, 2.0
        %v760 = vmul.f32 %v685, 2.0
        %v761 = vmul.f32 %v690, 2.0
        %v762 = vmul.f32 %v695, 2.0
        %v763 = vmul.f32 %v700, 2.0
        %v764 = vmul.f32 %v705, 2.0
        %v765 = vmul.f32 %v710, 2.0
        %v766 = vmul.f32 %v715, 2.0
        %v767 = vmul.f32 %v720, 2.0
        %v768 = vmul.f32 %v725, 2.0
        %v769 = vmul.f32 %v730, 2.0
        %v770 = vmul.f32 %v735, 2.0
        %v772 = vlaneseq
        %v773 = vshrl.u32 %v772, 7
        %v774 = vsub.s32 0, %v773
        %v775 = vrot.slane %v738, %v774
        %v777 = vsub.f32 %v775, %v739
        %v778 = vsub.f32 %v775, %v740
        %v779 = vsub.f32 %v775, %v741
        %v780 = vsub.f32 %v775, %v742
        %v781 = vsub.f32 %v775, %v743
        %v782 = vsub.f32 %v775, %v744
        %v783 = vsub.f32 %v775, %v745
        %v784 = vsub.f32 %v775, %v746
        %v785 = vsub.f32 %v775, %v747
        %v786 = vsub.f32 %v775, %v748
        %v787 = vsub.f32 %v775, %v749
        %v788 = vsub.f32 %v775, %v750
        %v789 = vsub.f32 %v775, %v751
        %v790 = vsub.f32 %v775, %v752
        %v791 = vsub.f32 %v775, %v753
        %v792 = vsub.f32 %v775, %v754
        %v793 = vsub.f32 %v775, %v755
        %v794 = vsub.f32 %v775, %v756
        %v795 = vsub.f32 %v775, %v757
        %v796 = vsub.f32 %v775, %v758
        %v797 = vsub.f32 %v775, %v759
        %v798 = vsub.f32 %v775, %v760
        %v799 = vsub.f32 %v775, %v761
        %v800 = vsub.f32 %v775, %v762
        %v801 = vsub.f32 %v775, %v763
        %v802 = vsub.f32 %v775, %v764
        %v803 = vsub.f32 %v775, %v765
        %v804 = vsub.f32 %v775, %v766
        %v805 = vsub.f32 %v775, %v767
        %v806 = vsub.f32 %v775, %v768
        %v807 = vsub.f32 %v775, %v769
        %v808 = vsub.f32 %v775, %v770
        %v809 = vmax.f32 %v777, 0.0
        %v810 = vmax.f32 %v778, 0.0
        %v811 = vmax.f32 %v779, 0.0
        %v812 = vmax.f32 %v780, 0.0
        %v813 = vmax.f32 %v781, 0.0
        %v814 = vmax.f32 %v782, 0.0
        %v815 = vmax.f32 %v783, 0.0
        %v816 = vmax.f32 %v784, 0.0
        %v817 = vmax.f32 %v785, 0.0
        %v818 = vmax.f32 %v786, 0.0
        %v819 = vmax.f32 %v787, 0.0
        %v820 = vmax.f32 %v788, 0.0
        %v821 = vmax.f32 %v789, 0.0
        %v822 = vmax.f32 %v790, 0.0
        %v823 = vmax.f32 %v791, 0.0
        %v824 = vmax.f32 %v792, 0.0
        %v825 = vmax.f32 %v793, 0.0
        %v826 = vmax.f32 %v794, 0.0
        %v827 = vmax.f32 %v795, 0.0
        %v828 = vmax.f32 %v796, 0.0
        %v829 = vmax.f32 %v797, 0.0
        %v830 = vmax.f32 %v798, 0.0
        %v831 = vmax.f32 %v799, 0.0
        %v832 = vmax.f32 %v800, 0.0
        %v833 = vmax.f32 %v801, 0.0
        %v834 = vmax.f32 %v802, 0.0
        %v835 = vmax.f32 %v803, 0.0
        %v836 = vmax.f32 %v804, 0.0
        %v837 = vmax.f32 %v805, 0.0
        %v838 = vmax.f32 %v806, 0.0
        %v839 = vmax.f32 %v807, 0.0
        %v840 = vmax.f32 %v808, 0.0
        %v841 = vrsqrt.pop %v809
        %v842 = vmul.f32 %v809, %v841
        %vm843 = vcmp.eq.f32.partialorder %v809, inf
        %v844 = vsel %vm843, %v809, %v842
        %vm845 = vcmp.eq.f32.partialorder %v809, 0.0
        %v846 = vand.u32 %v809, 2147483648
        %v847 = vsel %vm845, %v846, %v844
        %v848 = vrsqrt.pop %v810
        %v849 = vmul.f32 %v810, %v848
        %vm850 = vcmp.eq.f32.partialorder %v810, inf
        %v851 = vsel %vm850, %v810, %v849
        %vm852 = vcmp.eq.f32.partialorder %v810, 0.0
        %v853 = vand.u32 %v810, 2147483648
        %v854 = vsel %vm852, %v853, %v851
        %v855 = vrsqrt.pop %v811
        %v856 = vmul.f32 %v811, %v855
        %vm857 = vcmp.eq.f32.partialorder %v811, inf
        %v858 = vsel %vm857, %v811, %v856
        %vm859 = vcmp.eq.f32.partialorder %v811, 0.0
        %v860 = vand.u32 %v811, 2147483648
        %v861 = vsel %vm859, %v860, %v858
        %v862 = vrsqrt.pop %v812
        %v863 = vmul.f32 %v812, %v862
        %vm864 = vcmp.eq.f32.partialorder %v812, inf
        %v865 = vsel %vm864, %v812, %v863
        %vm866 = vcmp.eq.f32.partialorder %v812, 0.0
        %v867 = vand.u32 %v812, 2147483648
        %v868 = vsel %vm866, %v867, %v865
        %v869 = vrsqrt.pop %v813
        %v870 = vmul.f32 %v813, %v869
        %vm871 = vcmp.eq.f32.partialorder %v813, inf
        %v872 = vsel %vm871, %v813, %v870
        %vm873 = vcmp.eq.f32.partialorder %v813, 0.0
        %v874 = vand.u32 %v813, 2147483648
        %v875 = vsel %vm873, %v874, %v872
        %v876 = vrsqrt.pop %v814
        %v877 = vmul.f32 %v814, %v876
        %vm878 = vcmp.eq.f32.partialorder %v814, inf
        %v879 = vsel %vm878, %v814, %v877
        %vm880 = vcmp.eq.f32.partialorder %v814, 0.0
        %v881 = vand.u32 %v814, 2147483648
        %v882 = vsel %vm880, %v881, %v879
        %v883 = vrsqrt.pop %v815
        %v884 = vmul.f32 %v815, %v883
        %vm885 = vcmp.eq.f32.partialorder %v815, inf
        %v886 = vsel %vm885, %v815, %v884
        %vm887 = vcmp.eq.f32.partialorder %v815, 0.0
        %v888 = vand.u32 %v815, 2147483648
        %v889 = vsel %vm887, %v888, %v886
        %v890 = vrsqrt.pop %v816
        %v891 = vmul.f32 %v816, %v890
        %vm892 = vcmp.eq.f32.partialorder %v816, inf
        %v893 = vsel %vm892, %v816, %v891
        %vm894 = vcmp.eq.f32.partialorder %v816, 0.0
        %v895 = vand.u32 %v816, 2147483648
        %v896 = vsel %vm894, %v895, %v893
        %v897 = vrsqrt.pop %v817
        %v898 = vmul.f32 %v817, %v897
        %vm899 = vcmp.eq.f32.partialorder %v817, inf
        %v900 = vsel %vm899, %v817, %v898
        %vm901 = vcmp.eq.f32.partialorder %v817, 0.0
        %v902 = vand.u32 %v817, 2147483648
        %v903 = vsel %vm901, %v902, %v900
        %v904 = vrsqrt.pop %v818
        %v905 = vmul.f32 %v818, %v904
        %vm906 = vcmp.eq.f32.partialorder %v818, inf
        %v907 = vsel %vm906, %v818, %v905
        %vm908 = vcmp.eq.f32.partialorder %v818, 0.0
        %v909 = vand.u32 %v818, 2147483648
        %v910 = vsel %vm908, %v909, %v907
        %v911 = vrsqrt.pop %v819
        %v912 = vmul.f32 %v819, %v911
        %vm913 = vcmp.eq.f32.partialorder %v819, inf
        %v914 = vsel %vm913, %v819, %v912
        %vm915 = vcmp.eq.f32.partialorder %v819, 0.0
        %v916 = vand.u32 %v819, 2147483648
        %v917 = vsel %vm915, %v916, %v914
        %v918 = vrsqrt.pop %v820
        %v919 = vmul.f32 %v820, %v918
        %vm920 = vcmp.eq.f32.partialorder %v820, inf
        %v921 = vsel %vm920, %v820, %v919
        %vm922 = vcmp.eq.f32.partialorder %v820, 0.0
        %v923 = vand.u32 %v820, 2147483648
        %v924 = vsel %vm922, %v923, %v921
        %v925 = vrsqrt.pop %v821
        %v926 = vmul.f32 %v821, %v925
        %vm927 = vcmp.eq.f32.partialorder %v821, inf
        %v928 = vsel %vm927, %v821, %v926
        %vm929 = vcmp.eq.f32.partialorder %v821, 0.0
        %v930 = vand.u32 %v821, 2147483648
        %v931 = vsel %vm929, %v930, %v928
        %v932 = vrsqrt.pop %v822
        %v933 = vmul.f32 %v822, %v932
        %vm934 = vcmp.eq.f32.partialorder %v822, inf
        %v935 = vsel %vm934, %v822, %v933
        %vm936 = vcmp.eq.f32.partialorder %v822, 0.0
        %v937 = vand.u32 %v822, 2147483648
        %v938 = vsel %vm936, %v937, %v935
        %v939 = vrsqrt.pop %v823
        %v940 = vmul.f32 %v823, %v939
        %vm941 = vcmp.eq.f32.partialorder %v823, inf
        %v942 = vsel %vm941, %v823, %v940
        %vm943 = vcmp.eq.f32.partialorder %v823, 0.0
        %v944 = vand.u32 %v823, 2147483648
        %v945 = vsel %vm943, %v944, %v942
        %v946 = vrsqrt.pop %v824
        %v947 = vmul.f32 %v824, %v946
        %vm948 = vcmp.eq.f32.partialorder %v824, inf
        %v949 = vsel %vm948, %v824, %v947
        %vm950 = vcmp.eq.f32.partialorder %v824, 0.0
        %v951 = vand.u32 %v824, 2147483648
        %v952 = vsel %vm950, %v951, %v949
        %v953 = vrsqrt.pop %v825
        %v954 = vmul.f32 %v825, %v953
        %vm955 = vcmp.eq.f32.partialorder %v825, inf
        %v956 = vsel %vm955, %v825, %v954
        %vm957 = vcmp.eq.f32.partialorder %v825, 0.0
        %v958 = vand.u32 %v825, 2147483648
        %v959 = vsel %vm957, %v958, %v956
        %v960 = vrsqrt.pop %v826
        %v961 = vmul.f32 %v826, %v960
        %vm962 = vcmp.eq.f32.partialorder %v826, inf
        %v963 = vsel %vm962, %v826, %v961
        %vm964 = vcmp.eq.f32.partialorder %v826, 0.0
        %v965 = vand.u32 %v826, 2147483648
        %v966 = vsel %vm964, %v965, %v963
        %v967 = vrsqrt.pop %v827
        %v968 = vmul.f32 %v827, %v967
        %vm969 = vcmp.eq.f32.partialorder %v827, inf
        %v970 = vsel %vm969, %v827, %v968
        %vm971 = vcmp.eq.f32.partialorder %v827, 0.0
        %v972 = vand.u32 %v827, 2147483648
        %v973 = vsel %vm971, %v972, %v970
        %v974 = vrsqrt.pop %v828
        %v975 = vmul.f32 %v828, %v974
        %vm976 = vcmp.eq.f32.partialorder %v828, inf
        %v977 = vsel %vm976, %v828, %v975
        %vm978 = vcmp.eq.f32.partialorder %v828, 0.0
        %v979 = vand.u32 %v828, 2147483648
        %v980 = vsel %vm978, %v979, %v977
        %v981 = vrsqrt.pop %v829
        %v982 = vmul.f32 %v829, %v981
        %vm983 = vcmp.eq.f32.partialorder %v829, inf
        %v984 = vsel %vm983, %v829, %v982
        %vm985 = vcmp.eq.f32.partialorder %v829, 0.0
        %v986 = vand.u32 %v829, 2147483648
        %v987 = vsel %vm985, %v986, %v984
        %v988 = vrsqrt.pop %v830
        %v989 = vmul.f32 %v830, %v988
        %vm990 = vcmp.eq.f32.partialorder %v830, inf
        %v991 = vsel %vm990, %v830, %v989
        %vm992 = vcmp.eq.f32.partialorder %v830, 0.0
        %v993 = vand.u32 %v830, 2147483648
        %v994 = vsel %vm992, %v993, %v991
        %v995 = vrsqrt.pop %v831
        %v996 = vmul.f32 %v831, %v995
        %vm997 = vcmp.eq.f32.partialorder %v831, inf
        %v998 = vsel %vm997, %v831, %v996
        %vm999 = vcmp.eq.f32.partialorder %v831, 0.0
        %v1000 = vand.u32 %v831, 2147483648
        %v1001 = vsel %vm999, %v1000, %v998
        %v1002 = vrsqrt.pop %v832
        %v1003 = vmul.f32 %v832, %v1002
        %vm1004 = vcmp.eq.f32.partialorder %v832, inf
        %v1005 = vsel %vm1004, %v832, %v1003
        %vm1006 = vcmp.eq.f32.partialorder %v832, 0.0
        %v1007 = vand.u32 %v832, 2147483648
        %v1008 = vsel %vm1006, %v1007, %v1005
        %v1009 = vrsqrt.pop %v833
        %v1010 = vmul.f32 %v833, %v1009
        %vm1011 = vcmp.eq.f32.partialorder %v833, inf
        %v1012 = vsel %vm1011, %v833, %v1010
        %vm1013 = vcmp.eq.f32.partialorder %v833, 0.0
        %v1014 = vand.u32 %v833, 2147483648
        %v1015 = vsel %vm1013, %v1014, %v1012
        %v1016 = vrsqrt.pop %v834
        %v1017 = vmul.f32 %v834, %v1016
        %vm1018 = vcmp.eq.f32.partialorder %v834, inf
        %v1019 = vsel %vm1018, %v834, %v1017
        %vm1020 = vcmp.eq.f32.partialorder %v834, 0.0
        %v1021 = vand.u32 %v834, 2147483648
        %v1022 = vsel %vm1020, %v1021, %v1019
        %v1023 = vrsqrt.pop %v835
        %v1024 = vmul.f32 %v835, %v1023
        %vm1025 = vcmp.eq.f32.partialorder %v835, inf
        %v1026 = vsel %vm1025, %v835, %v1024
        %vm1027 = vcmp.eq.f32.partialorder %v835, 0.0
        %v1028 = vand.u32 %v835, 2147483648
        %v1029 = vsel %vm1027, %v1028, %v1026
        %v1030 = vrsqrt.pop %v836
        %v1031 = vmul.f32 %v836, %v1030
        %vm1032 = vcmp.eq.f32.partialorder %v836, inf
        %v1033 = vsel %vm1032, %v836, %v1031
        %vm1034 = vcmp.eq.f32.partialorder %v836, 0.0
        %v1035 = vand.u32 %v836, 2147483648
        %v1036 = vsel %vm1034, %v1035, %v1033
        %v1037 = vrsqrt.pop %v837
        %v1038 = vmul.f32 %v837, %v1037
        %vm1039 = vcmp.eq.f32.partialorder %v837, inf
        %v1040 = vsel %vm1039, %v837, %v1038
        %vm1041 = vcmp.eq.f32.partialorder %v837, 0.0
        %v1042 = vand.u32 %v837, 2147483648
        %v1043 = vsel %vm1041, %v1042, %v1040
        %v1044 = vrsqrt.pop %v838
        %v1045 = vmul.f32 %v838, %v1044
        %vm1046 = vcmp.eq.f32.partialorder %v838, inf
        %v1047 = vsel %vm1046, %v838, %v1045
        %vm1048 = vcmp.eq.f32.partialorder %v838, 0.0
        %v1049 = vand.u32 %v838, 2147483648
        %v1050 = vsel %vm1048, %v1049, %v1047
        %v1051 = vrsqrt.pop %v839
        %v1052 = vmul.f32 %v839, %v1051
        %vm1053 = vcmp.eq.f32.partialorder %v839, inf
        %v1054 = vsel %vm1053, %v839, %v1052
        %vm1055 = vcmp.eq.f32.partialorder %v839, 0.0
        %v1056 = vand.u32 %v839, 2147483648
        %v1057 = vsel %vm1055, %v1056, %v1054
        %v1058 = vrsqrt.pop %v840
        %v1059 = vmul.f32 %v840, %v1058
        %vm1060 = vcmp.eq.f32.partialorder %v840, inf
        %v1061 = vsel %vm1060, %v840, %v1059
        %vm1062 = vcmp.eq.f32.partialorder %v840, 0.0
        %v1063 = vand.u32 %v840, 2147483648
        %v1064 = vsel %vm1062, %v1063, %v1061
        %vm1065 = vcmask 523264
        %1066 = vst.msk [vmem:[%s258] sm:$0xff] %vm1065, %v847
        %1067 = vst.msk [vmem:[%s258 + $0x8] sm:$0xff] %vm1065, %v854
        %1068 = vst.msk [vmem:[%s258 + $0x10] sm:$0xff] %vm1065, %v861
        %1069 = vst.msk [vmem:[%s258 + $0x18] sm:$0xff] %vm1065, %v868
        %1070 = vst.msk [vmem:[%s258 + $0x20] sm:$0xff] %vm1065, %v875
        %1071 = vst.msk [vmem:[%s258 + $0x28] sm:$0xff] %vm1065, %v882
        %1072 = vst.msk [vmem:[%s258 + $0x30] sm:$0xff] %vm1065, %v889
        %1073 = vst.msk [vmem:[%s258 + $0x38] sm:$0xff] %vm1065, %v896
        %1074 = vst.msk [vmem:[%s258 + $0x40] sm:$0xff] %vm1065, %v903
        %1075 = vst.msk [vmem:[%s258 + $0x48] sm:$0xff] %vm1065, %v910
        %1076 = vst.msk [vmem:[%s258 + $0x50] sm:$0xff] %vm1065, %v917
        %1077 = vst.msk [vmem:[%s258 + $0x58] sm:$0xff] %vm1065, %v924
        %1078 = vst.msk [vmem:[%s258 + $0x60] sm:$0xff] %vm1065, %v931
        %1079 = vst.msk [vmem:[%s258 + $0x68] sm:$0xff] %vm1065, %v938
        %1080 = vst.msk [vmem:[%s258 + $0x70] sm:$0xff] %vm1065, %v945
        %1081 = vst.msk [vmem:[%s258 + $0x78] sm:$0xff] %vm1065, %v952
        %1082 = vst.msk [vmem:[%s258 + $0x80] sm:$0xff] %vm1065, %v959
        %1083 = vst.msk [vmem:[%s258 + $0x88] sm:$0xff] %vm1065, %v966
        %1084 = vst.msk [vmem:[%s258 + $0x90] sm:$0xff] %vm1065, %v973
        %1085 = vst.msk [vmem:[%s258 + $0x98] sm:$0xff] %vm1065, %v980
        %1086 = vst.msk [vmem:[%s258 + $0xa0] sm:$0xff] %vm1065, %v987
        %1087 = vst.msk [vmem:[%s258 + $0xa8] sm:$0xff] %vm1065, %v994
        %1088 = vst.msk [vmem:[%s258 + $0xb0] sm:$0xff] %vm1065, %v1001
        %1089 = vst.msk [vmem:[%s258 + $0xb8] sm:$0xff] %vm1065, %v1008
        %1090 = vst.msk [vmem:[%s258 + $0xc0] sm:$0xff] %vm1065, %v1015
        %1091 = vst.msk [vmem:[%s258 + $0xc8] sm:$0xff] %vm1065, %v1022
        %1092 = vst.msk [vmem:[%s258 + $0xd0] sm:$0xff] %vm1065, %v1029
        %1093 = vst.msk [vmem:[%s258 + $0xd8] sm:$0xff] %vm1065, %v1036
        %1094 = vst.msk [vmem:[%s258 + $0xe0] sm:$0xff] %vm1065, %v1043
        %1095 = vst.msk [vmem:[%s258 + $0xe8] sm:$0xff] %vm1065, %v1050
        %1096 = vst.msk [vmem:[%s258 + $0xf0] sm:$0xff] %vm1065, %v1057
        %1097 = vst.msk [vmem:[%s258 + $0xf8] sm:$0xff] %vm1065, %v1064
        %v1098 = vsel %vm1065, %v847, inf
        %1099 = vmin.xlane.f32.xlu0 %v1098
        %v1100 = vpop.xlane.xlu0 %1099
        %v1101 = vsel %vm1065, %v854, inf
        %1102 = vmin.xlane.f32.xlu0 %v1101
        %v1103 = vpop.xlane.xlu0 %1102
        %v1104 = vsel %vm1065, %v861, inf
        %1105 = vmin.xlane.f32.xlu0 %v1104
        %v1106 = vpop.xlane.xlu0 %1105
        %v1107 = vsel %vm1065, %v868, inf
        %1108 = vmin.xlane.f32.xlu0 %v1107
        %v1109 = vpop.xlane.xlu0 %1108
        %v1110 = vsel %vm1065, %v875, inf
        %1111 = vmin.xlane.f32.xlu0 %v1110
        %v1112 = vpop.xlane.xlu0 %1111
        %v1113 = vsel %vm1065, %v882, inf
        %1114 = vmin.xlane.f32.xlu0 %v1113
        %v1115 = vpop.xlane.xlu0 %1114
        %v1116 = vsel %vm1065, %v889, inf
        %1117 = vmin.xlane.f32.xlu0 %v1116
        %v1118 = vpop.xlane.xlu0 %1117
        %v1119 = vsel %vm1065, %v896, inf
        %1120 = vmin.xlane.f32.xlu0 %v1119
        %v1121 = vpop.xlane.xlu0 %1120
        %v1122 = vsel %vm1065, %v903, inf
        %1123 = vmin.xlane.f32.xlu0 %v1122
        %v1124 = vpop.xlane.xlu0 %1123
        %v1125 = vsel %vm1065, %v910, inf
        %1126 = vmin.xlane.f32.xlu0 %v1125
        %v1127 = vpop.xlane.xlu0 %1126
        %v1128 = vsel %vm1065, %v917, inf
        %1129 = vmin.xlane.f32.xlu0 %v1128
        %v1130 = vpop.xlane.xlu0 %1129
        %v1131 = vsel %vm1065, %v924, inf
        %1132 = vmin.xlane.f32.xlu0 %v1131
        %v1133 = vpop.xlane.xlu0 %1132
        %v1134 = vsel %vm1065, %v931, inf
        %1135 = vmin.xlane.f32.xlu0 %v1134
        %v1136 = vpop.xlane.xlu0 %1135
        %v1137 = vsel %vm1065, %v938, inf
        %1138 = vmin.xlane.f32.xlu0 %v1137
        %v1139 = vpop.xlane.xlu0 %1138
        %v1140 = vsel %vm1065, %v945, inf
        %1141 = vmin.xlane.f32.xlu0 %v1140
        %v1142 = vpop.xlane.xlu0 %1141
        %v1143 = vsel %vm1065, %v952, inf
        %1144 = vmin.xlane.f32.xlu0 %v1143
        %v1145 = vpop.xlane.xlu0 %1144
        %v1146 = vsel %vm1065, %v959, inf
        %1147 = vmin.xlane.f32.xlu0 %v1146
        %v1148 = vpop.xlane.xlu0 %1147
        %v1149 = vsel %vm1065, %v966, inf
        %1150 = vmin.xlane.f32.xlu0 %v1149
        %v1151 = vpop.xlane.xlu0 %1150
        %v1152 = vsel %vm1065, %v973, inf
        %1153 = vmin.xlane.f32.xlu0 %v1152
        %v1154 = vpop.xlane.xlu0 %1153
        %v1155 = vsel %vm1065, %v980, inf
        %1156 = vmin.xlane.f32.xlu0 %v1155
        %v1157 = vpop.xlane.xlu0 %1156
        %v1158 = vsel %vm1065, %v987, inf
        %1159 = vmin.xlane.f32.xlu0 %v1158
        %v1160 = vpop.xlane.xlu0 %1159
        %v1161 = vsel %vm1065, %v994, inf
        %1162 = vmin.xlane.f32.xlu0 %v1161
        %v1163 = vpop.xlane.xlu0 %1162
        %v1164 = vsel %vm1065, %v1001, inf
        %1165 = vmin.xlane.f32.xlu0 %v1164
        %v1166 = vpop.xlane.xlu0 %1165
        %v1167 = vsel %vm1065, %v1008, inf
        %1168 = vmin.xlane.f32.xlu0 %v1167
        %v1169 = vpop.xlane.xlu0 %1168
        %v1170 = vsel %vm1065, %v1015, inf
        %1171 = vmin.xlane.f32.xlu0 %v1170
        %v1172 = vpop.xlane.xlu0 %1171
        %v1173 = vsel %vm1065, %v1022, inf
        %1174 = vmin.xlane.f32.xlu0 %v1173
        %v1175 = vpop.xlane.xlu0 %1174
        %v1176 = vsel %vm1065, %v1029, inf
        %1177 = vmin.xlane.f32.xlu0 %v1176
        %v1178 = vpop.xlane.xlu0 %1177
        %v1179 = vsel %vm1065, %v1036, inf
        %1180 = vmin.xlane.f32.xlu0 %v1179
        %v1181 = vpop.xlane.xlu0 %1180
        %v1182 = vsel %vm1065, %v1043, inf
        %1183 = vmin.xlane.f32.xlu0 %v1182
        %v1184 = vpop.xlane.xlu0 %1183
        %v1185 = vsel %vm1065, %v1050, inf
        %1186 = vmin.xlane.f32.xlu0 %v1185
        %v1187 = vpop.xlane.xlu0 %1186
        %v1188 = vsel %vm1065, %v1057, inf
        %1189 = vmin.xlane.f32.xlu0 %v1188
        %v1190 = vpop.xlane.xlu0 %1189
        %v1191 = vsel %vm1065, %v1064, inf
        %1192 = vmin.xlane.f32.xlu0 %v1191
        %v1193 = vpop.xlane.xlu0 %1192
        %v1194 = vsub.f32 %v847, %v1100
        %v1195 = vsub.f32 %v854, %v1103
        %v1196 = vsub.f32 %v861, %v1106
        %v1197 = vsub.f32 %v868, %v1109
        %v1198 = vsub.f32 %v875, %v1112
        %v1199 = vsub.f32 %v882, %v1115
        %v1200 = vsub.f32 %v889, %v1118
        %v1201 = vsub.f32 %v896, %v1121
        %v1202 = vsub.f32 %v903, %v1124
        %v1203 = vsub.f32 %v910, %v1127
        %v1204 = vsub.f32 %v917, %v1130
        %v1205 = vsub.f32 %v924, %v1133
        %v1206 = vsub.f32 %v931, %v1136
        %v1207 = vsub.f32 %v938, %v1139
        %v1208 = vsub.f32 %v945, %v1142
        %v1209 = vsub.f32 %v952, %v1145
        %v1210 = vsub.f32 %v959, %v1148
        %v1211 = vsub.f32 %v966, %v1151
        %v1212 = vsub.f32 %v973, %v1154
        %v1213 = vsub.f32 %v980, %v1157
        %v1214 = vsub.f32 %v987, %v1160
        %v1215 = vsub.f32 %v994, %v1163
        %v1216 = vsub.f32 %v1001, %v1166
        %v1217 = vsub.f32 %v1008, %v1169
        %v1218 = vsub.f32 %v1015, %v1172
        %v1219 = vsub.f32 %v1022, %v1175
        %v1220 = vsub.f32 %v1029, %v1178
        %v1221 = vsub.f32 %v1036, %v1181
        %v1222 = vsub.f32 %v1043, %v1184
        %v1223 = vsub.f32 %v1050, %v1187
        %v1224 = vsub.f32 %v1057, %v1190
        %v1225 = vsub.f32 %v1064, %v1193
        %v1226 = vmul.f32 %v1194, -32.0
        %v1227 = vmul.f32 %v1195, -32.0
        %v1228 = vmul.f32 %v1196, -32.0
        %v1229 = vmul.f32 %v1197, -32.0
        %v1230 = vmul.f32 %v1198, -32.0
        %v1231 = vmul.f32 %v1199, -32.0
        %v1232 = vmul.f32 %v1200, -32.0
        %v1233 = vmul.f32 %v1201, -32.0
        %v1234 = vmul.f32 %v1202, -32.0
        %v1235 = vmul.f32 %v1203, -32.0
        %v1236 = vmul.f32 %v1204, -32.0
        %v1237 = vmul.f32 %v1205, -32.0
        %v1238 = vmul.f32 %v1206, -32.0
        %v1239 = vmul.f32 %v1207, -32.0
        %v1240 = vmul.f32 %v1208, -32.0
        %v1241 = vmul.f32 %v1209, -32.0
        %v1242 = vmul.f32 %v1210, -32.0
        %v1243 = vmul.f32 %v1211, -32.0
        %v1244 = vmul.f32 %v1212, -32.0
        %v1245 = vmul.f32 %v1213, -32.0
        %v1246 = vmul.f32 %v1214, -32.0
        %v1247 = vmul.f32 %v1215, -32.0
        %v1248 = vmul.f32 %v1216, -32.0
        %v1249 = vmul.f32 %v1217, -32.0
        %v1250 = vmul.f32 %v1218, -32.0
        %v1251 = vmul.f32 %v1219, -32.0
        %v1252 = vmul.f32 %v1220, -32.0
        %v1253 = vmul.f32 %v1221, -32.0
        %v1254 = vmul.f32 %v1222, -32.0
        %v1255 = vmul.f32 %v1223, -32.0
        %v1256 = vmul.f32 %v1224, -32.0
        %v1257 = vmul.f32 %v1225, -32.0
        %v1258 = vmul.f32 %v1226, 1.442695
        %v1259 = vpow.pop %v1258
        %v1260 = vmul.f32 %v1227, 1.442695
        %v1261 = vpow.pop %v1260
        %v1262 = vmul.f32 %v1228, 1.442695
        %v1263 = vpow.pop %v1262
        %v1264 = vmul.f32 %v1229, 1.442695
        %v1265 = vpow.pop %v1264
        %v1266 = vmul.f32 %v1230, 1.442695
        %v1267 = vpow.pop %v1266
        %v1268 = vmul.f32 %v1231, 1.442695
        %v1269 = vpow.pop %v1268
        %v1270 = vmul.f32 %v1232, 1.442695
        %v1271 = vpow.pop %v1270
        %v1272 = vmul.f32 %v1233, 1.442695
        %v1273 = vpow.pop %v1272
        %v1274 = vmul.f32 %v1234, 1.442695
        %v1275 = vpow.pop %v1274
        %v1276 = vmul.f32 %v1235, 1.442695
        %v1277 = vpow.pop %v1276
        %v1278 = vmul.f32 %v1236, 1.442695
        %v1279 = vpow.pop %v1278
        %v1280 = vmul.f32 %v1237, 1.442695
        %v1281 = vpow.pop %v1280
        %v1282 = vmul.f32 %v1238, 1.442695
        %v1283 = vpow.pop %v1282
        %v1284 = vmul.f32 %v1239, 1.442695
        %v1285 = vpow.pop %v1284
        %v1286 = vmul.f32 %v1240, 1.442695
        %v1287 = vpow.pop %v1286
        %v1288 = vmul.f32 %v1241, 1.442695
        %v1289 = vpow.pop %v1288
        %v1290 = vmul.f32 %v1242, 1.442695
        %v1291 = vpow.pop %v1290
        %v1292 = vmul.f32 %v1243, 1.442695
        %v1293 = vpow.pop %v1292
        %v1294 = vmul.f32 %v1244, 1.442695
        %v1295 = vpow.pop %v1294
        %v1296 = vmul.f32 %v1245, 1.442695
        %v1297 = vpow.pop %v1296
        %v1298 = vmul.f32 %v1246, 1.442695
        %v1299 = vpow.pop %v1298
        %v1300 = vmul.f32 %v1247, 1.442695
        %v1301 = vpow.pop %v1300
        %v1302 = vmul.f32 %v1248, 1.442695
        %v1303 = vpow.pop %v1302
        %v1304 = vmul.f32 %v1249, 1.442695
        %v1305 = vpow.pop %v1304
        %v1306 = vmul.f32 %v1250, 1.442695
        %v1307 = vpow.pop %v1306
        %v1308 = vmul.f32 %v1251, 1.442695
        %v1309 = vpow.pop %v1308
        %v1310 = vmul.f32 %v1252, 1.442695
        %v1311 = vpow.pop %v1310
        %v1312 = vmul.f32 %v1253, 1.442695
        %v1313 = vpow.pop %v1312
        %v1314 = vmul.f32 %v1254, 1.442695
        %v1315 = vpow.pop %v1314
        %v1316 = vmul.f32 %v1255, 1.442695
        %v1317 = vpow.pop %v1316
        %v1318 = vmul.f32 %v1256, 1.442695
        %v1319 = vpow.pop %v1318
        %v1320 = vmul.f32 %v1257, 1.442695
        %v1321 = vpow.pop %v1320
        %v1322 = vsel %vm1065, %v1259, 0.0
        %1323 = vadd.xlane.f32.xlu0 %v1322
        %v1324 = vpop.xlane.xlu0 %1323
        %v1325 = vsel %vm1065, %v1261, 0.0
        %1326 = vadd.xlane.f32.xlu0 %v1325
        %v1327 = vpop.xlane.xlu0 %1326
        %v1328 = vsel %vm1065, %v1263, 0.0
        %1329 = vadd.xlane.f32.xlu0 %v1328
        %v1330 = vpop.xlane.xlu0 %1329
        %v1331 = vsel %vm1065, %v1265, 0.0
        %1332 = vadd.xlane.f32.xlu0 %v1331
        %v1333 = vpop.xlane.xlu0 %1332
        %v1334 = vsel %vm1065, %v1267, 0.0
        %1335 = vadd.xlane.f32.xlu0 %v1334
        %v1336 = vpop.xlane.xlu0 %1335
        %v1337 = vsel %vm1065, %v1269, 0.0
        %1338 = vadd.xlane.f32.xlu0 %v1337
        %v1339 = vpop.xlane.xlu0 %1338
        %v1340 = vsel %vm1065, %v1271, 0.0
        %1341 = vadd.xlane.f32.xlu0 %v1340
        %v1342 = vpop.xlane.xlu0 %1341
        %v1343 = vsel %vm1065, %v1273, 0.0
        %1344 = vadd.xlane.f32.xlu0 %v1343
        %v1345 = vpop.xlane.xlu0 %1344
        %v1346 = vsel %vm1065, %v1275, 0.0
        %1347 = vadd.xlane.f32.xlu0 %v1346
        %v1348 = vpop.xlane.xlu0 %1347
        %v1349 = vsel %vm1065, %v1277, 0.0
        %1350 = vadd.xlane.f32.xlu0 %v1349
        %v1351 = vpop.xlane.xlu0 %1350
        %v1352 = vsel %vm1065, %v1279, 0.0
        %1353 = vadd.xlane.f32.xlu0 %v1352
        %v1354 = vpop.xlane.xlu0 %1353
        %v1355 = vsel %vm1065, %v1281, 0.0
        %1356 = vadd.xlane.f32.xlu0 %v1355
        %v1357 = vpop.xlane.xlu0 %1356
        %v1358 = vsel %vm1065, %v1283, 0.0
        %1359 = vadd.xlane.f32.xlu0 %v1358
        %v1360 = vpop.xlane.xlu0 %1359
        %v1361 = vsel %vm1065, %v1285, 0.0
        %1362 = vadd.xlane.f32.xlu0 %v1361
        %v1363 = vpop.xlane.xlu0 %1362
        %v1364 = vsel %vm1065, %v1287, 0.0
        %1365 = vadd.xlane.f32.xlu0 %v1364
        %v1366 = vpop.xlane.xlu0 %1365
        %v1367 = vsel %vm1065, %v1289, 0.0
        %1368 = vadd.xlane.f32.xlu0 %v1367
        %v1369 = vpop.xlane.xlu0 %1368
        %v1370 = vsel %vm1065, %v1291, 0.0
        %1371 = vadd.xlane.f32.xlu0 %v1370
        %v1372 = vpop.xlane.xlu0 %1371
        %v1373 = vsel %vm1065, %v1293, 0.0
        %1374 = vadd.xlane.f32.xlu0 %v1373
        %v1375 = vpop.xlane.xlu0 %1374
        %v1376 = vsel %vm1065, %v1295, 0.0
        %1377 = vadd.xlane.f32.xlu0 %v1376
        %v1378 = vpop.xlane.xlu0 %1377
        %v1379 = vsel %vm1065, %v1297, 0.0
        %1380 = vadd.xlane.f32.xlu0 %v1379
        %v1381 = vpop.xlane.xlu0 %1380
        %v1382 = vsel %vm1065, %v1299, 0.0
        %1383 = vadd.xlane.f32.xlu0 %v1382
        %v1384 = vpop.xlane.xlu0 %1383
        %v1385 = vsel %vm1065, %v1301, 0.0
        %1386 = vadd.xlane.f32.xlu0 %v1385
        %v1387 = vpop.xlane.xlu0 %1386
        %v1388 = vsel %vm1065, %v1303, 0.0
        %1389 = vadd.xlane.f32.xlu0 %v1388
        %v1390 = vpop.xlane.xlu0 %1389
        %v1391 = vsel %vm1065, %v1305, 0.0
        %1392 = vadd.xlane.f32.xlu0 %v1391
        %v1393 = vpop.xlane.xlu0 %1392
        %v1394 = vsel %vm1065, %v1307, 0.0
        %1395 = vadd.xlane.f32.xlu0 %v1394
        %v1396 = vpop.xlane.xlu0 %1395
        %v1397 = vsel %vm1065, %v1309, 0.0
        %1398 = vadd.xlane.f32.xlu0 %v1397
        %v1399 = vpop.xlane.xlu0 %1398
        %v1400 = vsel %vm1065, %v1311, 0.0
        %1401 = vadd.xlane.f32.xlu0 %v1400
        %v1402 = vpop.xlane.xlu0 %1401
        %v1403 = vsel %vm1065, %v1313, 0.0
        %1404 = vadd.xlane.f32.xlu0 %v1403
        %v1405 = vpop.xlane.xlu0 %1404
        %v1406 = vsel %vm1065, %v1315, 0.0
        %1407 = vadd.xlane.f32.xlu0 %v1406
        %v1408 = vpop.xlane.xlu0 %1407
        %v1409 = vsel %vm1065, %v1317, 0.0
        %1410 = vadd.xlane.f32.xlu0 %v1409
        %v1411 = vpop.xlane.xlu0 %1410
        %v1412 = vsel %vm1065, %v1319, 0.0
        %1413 = vadd.xlane.f32.xlu0 %v1412
        %v1414 = vpop.xlane.xlu0 %1413
        %v1415 = vsel %vm1065, %v1321, 0.0
        %1416 = vadd.xlane.f32.xlu0 %v1415
        %v1417 = vpop.xlane.xlu0 %1416
        %v1418 = vrcp.pop %v1324
        %v1419 = vrcp.pop %v1327
        %v1420 = vrcp.pop %v1330
        %v1421 = vrcp.pop %v1333
        %v1422 = vrcp.pop %v1336
        %v1423 = vrcp.pop %v1339
        %v1424 = vrcp.pop %v1342
        %v1425 = vrcp.pop %v1345
        %v1426 = vrcp.pop %v1348
        %v1427 = vrcp.pop %v1351
        %v1428 = vrcp.pop %v1354
        %v1429 = vrcp.pop %v1357
        %v1430 = vrcp.pop %v1360
        %v1431 = vrcp.pop %v1363
        %v1432 = vrcp.pop %v1366
        %v1433 = vrcp.pop %v1369
        %v1434 = vrcp.pop %v1372
        %v1435 = vrcp.pop %v1375
        %v1436 = vrcp.pop %v1378
        %v1437 = vrcp.pop %v1381
        %v1438 = vrcp.pop %v1384
        %v1439 = vrcp.pop %v1387
        %v1440 = vrcp.pop %v1390
        %v1441 = vrcp.pop %v1393
        %v1442 = vrcp.pop %v1396
        %v1443 = vrcp.pop %v1399
        %v1444 = vrcp.pop %v1402
        %v1445 = vrcp.pop %v1405
        %v1446 = vrcp.pop %v1408
        %v1447 = vrcp.pop %v1411
        %v1448 = vrcp.pop %v1414
        %v1449 = vrcp.pop %v1417
        %v1450 = vmul.f32 %v1324, %v1418
        %v1451 = vmul.f32 %v1327, %v1419
        %v1452 = vmul.f32 %v1330, %v1420
        %v1453 = vmul.f32 %v1333, %v1421
        %v1454 = vmul.f32 %v1336, %v1422
        %v1455 = vmul.f32 %v1339, %v1423
        %v1456 = vmul.f32 %v1342, %v1424
        %v1457 = vmul.f32 %v1345, %v1425
        %v1458 = vmul.f32 %v1348, %v1426
        %v1459 = vmul.f32 %v1351, %v1427
        %v1460 = vmul.f32 %v1354, %v1428
        %v1461 = vmul.f32 %v1357, %v1429
        %v1462 = vmul.f32 %v1360, %v1430
        %v1463 = vmul.f32 %v1363, %v1431
        %v1464 = vmul.f32 %v1366, %v1432
        %v1465 = vmul.f32 %v1369, %v1433
        %v1466 = vmul.f32 %v1372, %v1434
        %v1467 = vmul.f32 %v1375, %v1435
        %v1468 = vmul.f32 %v1378, %v1436
        %v1469 = vmul.f32 %v1381, %v1437
        %v1470 = vmul.f32 %v1384, %v1438
        %v1471 = vmul.f32 %v1387, %v1439
        %v1472 = vmul.f32 %v1390, %v1440
        %v1473 = vmul.f32 %v1393, %v1441
        %v1474 = vmul.f32 %v1396, %v1442
        %v1475 = vmul.f32 %v1399, %v1443
        %v1476 = vmul.f32 %v1402, %v1444
        %v1477 = vmul.f32 %v1405, %v1445
        %v1478 = vmul.f32 %v1408, %v1446
        %v1479 = vmul.f32 %v1411, %v1447
        %v1480 = vmul.f32 %v1414, %v1448
        %v1481 = vmul.f32 %v1417, %v1449
        %v1482 = vsub.f32 2.0, %v1450
        %v1483 = vsub.f32 2.0, %v1451
        %v1484 = vsub.f32 2.0, %v1452
        %v1485 = vsub.f32 2.0, %v1453
        %v1486 = vsub.f32 2.0, %v1454
        %v1487 = vsub.f32 2.0, %v1455
        %v1488 = vsub.f32 2.0, %v1456
        %v1489 = vsub.f32 2.0, %v1457
        %v1490 = vsub.f32 2.0, %v1458
        %v1491 = vsub.f32 2.0, %v1459
        %v1492 = vsub.f32 2.0, %v1460
        %v1493 = vsub.f32 2.0, %v1461
        %v1494 = vsub.f32 2.0, %v1462
        %v1495 = vsub.f32 2.0, %v1463
        %v1496 = vsub.f32 2.0, %v1464
        %v1497 = vsub.f32 2.0, %v1465
        %v1498 = vsub.f32 2.0, %v1466
        %v1499 = vsub.f32 2.0, %v1467
        %v1500 = vsub.f32 2.0, %v1468
        %v1501 = vsub.f32 2.0, %v1469
        %v1502 = vsub.f32 2.0, %v1470
        %v1503 = vsub.f32 2.0, %v1471
        %v1504 = vsub.f32 2.0, %v1472
        %v1505 = vsub.f32 2.0, %v1473
        %v1506 = vsub.f32 2.0, %v1474
        %v1507 = vsub.f32 2.0, %v1475
        %v1508 = vsub.f32 2.0, %v1476
        %v1509 = vsub.f32 2.0, %v1477
        %v1510 = vsub.f32 2.0, %v1478
        %v1511 = vsub.f32 2.0, %v1479
        %v1512 = vsub.f32 2.0, %v1480
        %v1513 = vsub.f32 2.0, %v1481
        %v1514 = vmul.f32 %v1418, %v1482
        %v1515 = vmul.f32 %v1419, %v1483
        %v1516 = vmul.f32 %v1420, %v1484
        %v1517 = vmul.f32 %v1421, %v1485
        %v1518 = vmul.f32 %v1422, %v1486
        %v1519 = vmul.f32 %v1423, %v1487
        %v1520 = vmul.f32 %v1424, %v1488
        %v1521 = vmul.f32 %v1425, %v1489
        %v1522 = vmul.f32 %v1426, %v1490
        %v1523 = vmul.f32 %v1427, %v1491
        %v1524 = vmul.f32 %v1428, %v1492
        %v1525 = vmul.f32 %v1429, %v1493
        %v1526 = vmul.f32 %v1430, %v1494
        %v1527 = vmul.f32 %v1431, %v1495
        %v1528 = vmul.f32 %v1432, %v1496
        %v1529 = vmul.f32 %v1433, %v1497
        %v1530 = vmul.f32 %v1434, %v1498
        %v1531 = vmul.f32 %v1435, %v1499
        %v1532 = vmul.f32 %v1436, %v1500
        %v1533 = vmul.f32 %v1437, %v1501
        %v1534 = vmul.f32 %v1438, %v1502
        %v1535 = vmul.f32 %v1439, %v1503
        %v1536 = vmul.f32 %v1440, %v1504
        %v1537 = vmul.f32 %v1441, %v1505
        %v1538 = vmul.f32 %v1442, %v1506
        %v1539 = vmul.f32 %v1443, %v1507
        %v1540 = vmul.f32 %v1444, %v1508
        %v1541 = vmul.f32 %v1445, %v1509
        %v1542 = vmul.f32 %v1446, %v1510
        %v1543 = vmul.f32 %v1447, %v1511
        %v1544 = vmul.f32 %v1448, %v1512
        %v1545 = vmul.f32 %v1449, %v1513
        %v1546 = vmul.f32 %v1259, %v1514
        %v1547 = vmul.f32 %v1261, %v1515
        %v1548 = vmul.f32 %v1263, %v1516
        %v1549 = vmul.f32 %v1265, %v1517
        %v1550 = vmul.f32 %v1267, %v1518
        %v1551 = vmul.f32 %v1269, %v1519
        %v1552 = vmul.f32 %v1271, %v1520
        %v1553 = vmul.f32 %v1273, %v1521
        %v1554 = vmul.f32 %v1275, %v1522
        %v1555 = vmul.f32 %v1277, %v1523
        %v1556 = vmul.f32 %v1279, %v1524
        %v1557 = vmul.f32 %v1281, %v1525
        %v1558 = vmul.f32 %v1283, %v1526
        %v1559 = vmul.f32 %v1285, %v1527
        %v1560 = vmul.f32 %v1287, %v1528
        %v1561 = vmul.f32 %v1289, %v1529
        %v1562 = vmul.f32 %v1291, %v1530
        %v1563 = vmul.f32 %v1293, %v1531
        %v1564 = vmul.f32 %v1295, %v1532
        %v1565 = vmul.f32 %v1297, %v1533
        %v1566 = vmul.f32 %v1299, %v1534
        %v1567 = vmul.f32 %v1301, %v1535
        %v1568 = vmul.f32 %v1303, %v1536
        %v1569 = vmul.f32 %v1305, %v1537
        %v1570 = vmul.f32 %v1307, %v1538
        %v1571 = vmul.f32 %v1309, %v1539
        %v1572 = vmul.f32 %v1311, %v1540
        %v1573 = vmul.f32 %v1313, %v1541
        %v1574 = vmul.f32 %v1315, %v1542
        %v1575 = vmul.f32 %v1317, %v1543
        %v1576 = vmul.f32 %v1319, %v1544
        %v1577 = vmul.f32 %v1321, %v1545
        %1578 = vst.msk [vmem:[%s268] sm:$0xff] %vm1065, %v1546
        %1579 = vst.msk [vmem:[%s268 + $0x8] sm:$0xff] %vm1065, %v1547
        %1580 = vst.msk [vmem:[%s268 + $0x10] sm:$0xff] %vm1065, %v1548
        %1581 = vst.msk [vmem:[%s268 + $0x18] sm:$0xff] %vm1065, %v1549
        %1582 = vst.msk [vmem:[%s268 + $0x20] sm:$0xff] %vm1065, %v1550
        %1583 = vst.msk [vmem:[%s268 + $0x28] sm:$0xff] %vm1065, %v1551
        %1584 = vst.msk [vmem:[%s268 + $0x30] sm:$0xff] %vm1065, %v1552
        %1585 = vst.msk [vmem:[%s268 + $0x38] sm:$0xff] %vm1065, %v1553
        %1586 = vst.msk [vmem:[%s268 + $0x40] sm:$0xff] %vm1065, %v1554
        %1587 = vst.msk [vmem:[%s268 + $0x48] sm:$0xff] %vm1065, %v1555
        %1588 = vst.msk [vmem:[%s268 + $0x50] sm:$0xff] %vm1065, %v1556
        %1589 = vst.msk [vmem:[%s268 + $0x58] sm:$0xff] %vm1065, %v1557
        %1590 = vst.msk [vmem:[%s268 + $0x60] sm:$0xff] %vm1065, %v1558
        %1591 = vst.msk [vmem:[%s268 + $0x68] sm:$0xff] %vm1065, %v1559
        %1592 = vst.msk [vmem:[%s268 + $0x70] sm:$0xff] %vm1065, %v1560
        %1593 = vst.msk [vmem:[%s268 + $0x78] sm:$0xff] %vm1065, %v1561
        %1594 = vst.msk [vmem:[%s268 + $0x80] sm:$0xff] %vm1065, %v1562
        %1595 = vst.msk [vmem:[%s268 + $0x88] sm:$0xff] %vm1065, %v1563
        %1596 = vst.msk [vmem:[%s268 + $0x90] sm:$0xff] %vm1065, %v1564
        %1597 = vst.msk [vmem:[%s268 + $0x98] sm:$0xff] %vm1065, %v1565
        %1598 = vst.msk [vmem:[%s268 + $0xa0] sm:$0xff] %vm1065, %v1566
        %1599 = vst.msk [vmem:[%s268 + $0xa8] sm:$0xff] %vm1065, %v1567
        %1600 = vst.msk [vmem:[%s268 + $0xb0] sm:$0xff] %vm1065, %v1568
        %1601 = vst.msk [vmem:[%s268 + $0xb8] sm:$0xff] %vm1065, %v1569
        %1602 = vst.msk [vmem:[%s268 + $0xc0] sm:$0xff] %vm1065, %v1570
        %1603 = vst.msk [vmem:[%s268 + $0xc8] sm:$0xff] %vm1065, %v1571
        %1604 = vst.msk [vmem:[%s268 + $0xd0] sm:$0xff] %vm1065, %v1572
        %1605 = vst.msk [vmem:[%s268 + $0xd8] sm:$0xff] %vm1065, %v1573
        %1606 = vst.msk [vmem:[%s268 + $0xe0] sm:$0xff] %vm1065, %v1574
        %1607 = vst.msk [vmem:[%s268 + $0xe8] sm:$0xff] %vm1065, %v1575
        %1608 = vst.msk [vmem:[%s268 + $0xf0] sm:$0xff] %vm1065, %v1576
        %1609 = vst.msk [vmem:[%s268 + $0xf8] sm:$0xff] %vm1065, %v1577
        %s1610 = smul.u32 32, %s24
        %p1611 = scmp.lt.s32.totalorder %s23, 1
        %s1612 = scalar_select %p1611, %s23, 1
        %p1613 = scmp.lt.s32.totalorder %s1610, 31
        %s1614 = scalar_select %p1613, %s1610, 31
        %s1615 = smul.addr %s1612, 32
        %s1616 = sadd.s32 %s1614, %s1615
        %s1617 = smul.addr %s1616, 8
        %s1618 = scalar_lea.vmem %s3, %s1617
        %s1619 = smul.u32 32, %s24
        %p1620 = scmp.lt.s32.totalorder %s23, 1
        %s1621 = scalar_select %p1620, %s23, 1
        %p1622 = scmp.lt.s32.totalorder %s1619, 31
        %s1623 = scalar_select %p1622, %s1619, 31
        %s1624 = smul.addr %s1621, 32
        %s1625 = sadd.s32 %s1623, %s1624
        %s1626 = smul.addr %s1625, 8
        %s1627 = scalar_lea.vmem %s4, %s1626
        // Predicated region
        $region37: #{tpu_custom_call.1} parent=31 // pred_check
          %p1628 = pneg %p121
        $region38: #{tpu_custom_call.1} parent=31 // pred_check_branch
          %1630 = sbr.rel (%p1628) target = $region40
        $region39: #{tpu_custom_call.1} parent=31 // pred_region
          %s1631 = smul.u32 32, %s24
        $region40: #{tpu_custom_call.1} parent=31 // pred_fallthru
          _
        // Predicated region
        $region41: #{tpu_custom_call.1} parent=31 // pred_check
          %p1632 = pneg %p149
        $region42: #{tpu_custom_call.1} parent=31 // pred_check_branch
          %1634 = sbr.rel (%p1632) target = $region44
        $region43: #{tpu_custom_call.1} parent=31 // pred_region
          %s1635 = smul.u32 32, %s24
        $region44: #{tpu_custom_call.1} parent=31 // pred_fallthru
          _
      $region32: #{tpu_custom_call.1} parent=5 // pred_fallthru
        _
      %p1636 = scmp.le.s32.totalorder 2, %s14
      // Predicated region
      $region45: #{tpu_custom_call.1} parent=5 // pred_check
        %p1637 = pneg %p1636
      $region46: #{tpu_custom_call.1} parent=5 // pred_check_branch
        %1639 = sbr.rel (%p1637) target = $region48
      $region47: #{tpu_custom_call.1} parent=5 // pred_region
        %s1640 = ssub.s32 %s14, 2
        // Predicated region
        $region49: #{tpu_custom_call.1} parent=47 // pred_check
          %p1641 = pneg %p127
        $region50: #{tpu_custom_call.1} parent=47 // pred_check_branch
          %1643 = sbr.rel (%p1641) target = $region52
        $region51: #{tpu_custom_call.1} parent=47 // pred_region
          %s1644 = smul.u32 32, %s26
          %p1645 = scmp.lt.s32.totalorder %s25, 1
          %s1646 = scalar_select %p1645, %s25, 1
          %p1647 = scmp.lt.s32.totalorder %s1644, 31
          %s1648 = scalar_select %p1647, %s1644, 31
          %s1649 = smul.addr %s1646, 32
          %s1650 = sadd.s32 %s1648, %s1649
          %s1651 = smul.addr %s1650, 8
          %s1652 = scalar_lea.vmem %s3, %s1651
        $region52: #{tpu_custom_call.1} parent=47 // pred_fallthru
          _
        // Predicated region
        $region53: #{tpu_custom_call.1} parent=47 // pred_check
          %p1653 = pneg %p155
        $region54: #{tpu_custom_call.1} parent=47 // pred_check_branch
          %1655 = sbr.rel (%p1653) target = $region56
        $region55: #{tpu_custom_call.1} parent=47 // pred_region
          %s1656 = smul.u32 32, %s26
          %p1657 = scmp.lt.s32.totalorder %s25, 1
          %s1658 = scalar_select %p1657, %s25, 1
          %p1659 = scmp.lt.s32.totalorder %s1656, 31
          %s1660 = scalar_select %p1659, %s1656, 31
          %s1661 = smul.addr %s1658, 32
          %s1662 = sadd.s32 %s1660, %s1661
          %s1663 = smul.addr %s1662, 8
          %s1664 = scalar_lea.vmem %s4, %s1663
        $region56: #{tpu_custom_call.1} parent=47 // pred_fallthru
          _
      $region48: #{tpu_custom_call.1} parent=5 // pred_fallthru
        _
    $region6: #{tpu_custom_call.1} parent=1 // loop_footer
      %s18 = sadd.s32 1, %s14
    $region7: #{tpu_custom_call.1} parent=1 // loop_footer_branch
      %13 = sbr.rel target = $region3
    $region8: #{tpu_custom_call.1} parent=1 // loop_exit
      _
    %1665 = vsyncpa [#allocation3], 1
    %s1666 = scalar_lea.sflag [#allocation3], 1
    %1667 = vsyncpa %s1666, 1

</llo_original>
